<compile_context>
chip_gen: v7x
topology: tpu7x:2x2x1
jax: 0.10.0
libtpu: 0.0.40
codegen_flags: <defaults>
</compile_context>

<pallas_src>
import jax
import jax.numpy as jnp
import numpy as np
from jax.experimental import pallas as pl
from jax.experimental.pallas import tpu as pltpu

EPS = 1e-6       # GeMFreq eps
HIDDEN = 512     # fixed by nn.Linear(in_chans, 512)
LANE = 128


def _round_up(n, m):
    return (n + m - 1) // m * m


def make_atthead_params(key, in_chans, num_class, p_init=3.0):
    """Deterministic synthetic parameters (shapes follow AttHead.__init__)."""
    k1, k2, k3, k4, k5, k6 = jax.random.split(key, 6)
    p = jnp.full((1,), p_init, jnp.float32)                                # GeMFreq.p
    w1 = jax.random.normal(k1, (in_chans, HIDDEN), jnp.float32) * 0.05     # Linear weight (transposed)
    b1 = jax.random.normal(k2, (1, HIDDEN), jnp.float32) * 0.05            # Linear bias
    wa = jax.random.normal(k3, (HIDDEN, num_class), jnp.float32) * 0.05    # attention 1x1 conv W (transposed)
    ba = jax.random.normal(k4, (1, num_class), jnp.float32) * 0.05         # attention bias
    wf = jax.random.normal(k5, (HIDDEN, num_class), jnp.float32) * 0.05    # fix_scale 1x1 conv W (transposed)
    bf = jax.random.normal(k6, (1, num_class), jnp.float32) * 0.05         # fix_scale bias
    return (p, w1, b1, wa, ba, wf, bf)


def _crop_bounds(T, train_period, infer_period):
    # mirrors the python-float arithmetic + int() truncation in the torch code
    assert train_period >= infer_period
    if train_period == infer_period:
        return 0, T
    ratio = infer_period / train_period
    start_f = T / 2 - T * ratio / 2
    end_f = start_f + T * ratio
    return int(start_f), int(end_f)


def _pick_batch_block(B, Tc):
    """Target BB*Tc >= 256 (MXU height on v6e/v7x) when the batch allows,
    but prefer >= 2 grid steps (v7x megacore) when splitting keeps M >= 128."""
    bb = min(B, max(1, -(-256 // Tc)))
    if bb == B and B > 1:
        half = -(-B // 2)
        if half * Tc >= 128:
            bb = half
    return bb


def atthead_forward(x_nchw, params, train_period=15.0, infer_period=5.0,
                    batch_block=None):
    """Eval-mode AttHead.forward.  Returns (logits, clipwise_pred,
    fix_scale(feat).permute(0,2,1), time_att.permute(0,2,1))."""
    p, w1, b1, wa, ba, wf, bf = params
    B, C, F_, T = x_nchw.shape
    nc = wa.shape[1]
    start, end = _crop_bounds(T, train_period, infer_period)
    Tc = end - start

    NCP = _round_up(nc, LANE)           # lane-dense class width (397 -> 512)
    NCAT = 2 * NCP                      # fused attention|fix_scale output width
    BB = _pick_batch_block(B, Tc) if batch_block is None else min(B, batch_block)
    Bp = _round_up(B, BB)
    G = Bp // BB                        # grid steps over batch
    M = BB * Tc                         # matmul M per grid step

    # --- wrapper-side layout plumbing: pad classes, fuse 1x1 convs, bf16 W ---
    wa_p = jnp.pad(wa, ((0, 0), (0, NCP - nc)))
    wf_p = jnp.pad(wf, ((0, 0), (0, NCP - nc)))
    ba_p = jnp.pad(ba, ((0, 0), (0, NCP - nc)))
    bf_p = jnp.pad(bf, ((0, 0), (0, NCP - nc)))
    wcat = jnp.concatenate([wa_p, wf_p], axis=1).astype(jnp.bfloat16)  # (512, 2*NCP)
    bcat = jnp.concatenate([ba_p, bf_p], axis=1)                       # (1,   2*NCP) f32
    w1_bf = w1.astype(jnp.bfloat16)                                    # (C, 512)

    # crop FIRST, then relayout (B,C,F,T) -> (B,Tc,F,C) in one fused XLA pass
    x = jnp.transpose(x_nchw[:, :, :, start:end], (0, 3, 2, 1))
    if Bp != B:
        x = jnp.pad(x, ((0, Bp - B), (0, 0), (0, 0), (0, 0)))

    def kernel(p_ref, x_ref, w1_ref, b1_ref, wcat_ref, bcat_ref,
               lc_ref, fs_ref, tatt_ref):
        pval = p_ref[0]                                   # scalar GeM exponent (SMEM)
        inv_p = 1.0 / pval

        # GeMFreq on the cropped window only: mean over freq of clamp^p, ^(1/p).
        # (batch, time) folded into one M axis — leading-dim flatten, no relayout.
        xb = x_ref[...].reshape(M, F_, C)                 # (M, F, C) f32
        pooled = jnp.mean(jnp.maximum(xb, EPS) ** pval, axis=1) ** inv_p   # (M, C)

        # dense_layers: Dropout (identity, eval) -> Linear -> ReLU -> Dropout
        h = jnp.dot(pooled.astype(jnp.bfloat16), w1_ref[...],
                    preferred_element_type=jnp.float32) + b1_ref[...]
        h = jnp.maximum(h, 0.0)                           # (M, 512) f32

        # fused attention | fix_scale 1x1 convs: one bf16 MXU pass, N = 2*NCP
        z = jnp.dot(h.astype(jnp.bfloat16), wcat_ref[...],
                    preferred_element_type=jnp.float32) + bcat_ref[...]    # (M, 2*NCP)
        ta3 = jnp.tanh(z[:, :NCP]).reshape(BB, Tc, NCP)   # time_att (cropped window)
        fs3 = z[:, NCP:].reshape(BB, Tc, NCP)             # fix_scale (cropped window)

        # softmax over the (already-cropped) time axis, per batch / class
        mx = jnp.max(ta3, axis=1, keepdims=True)
        e = jnp.exp(ta3 - mx)
        att = e * pl.reciprocal(jnp.sum(e, axis=1, keepdims=True), approx=True)

        logits = jnp.sum(fs3 * att, axis=1)                   # (BB, NCP)
        clip = jnp.sum(jax.nn.sigmoid(fs3) * att, axis=1)     # (BB, NCP)

        lc_ref[...] = jnp.concatenate([logits, clip], axis=-1)[None]   # (1, BB, 2*NCP)
        fs_ref[...] = fs3
        tatt_ref[...] = ta3

    out_shape = (
        jax.ShapeDtypeStruct((G, BB, NCAT), jnp.float32),   # lane-packed logits|clipwise
        jax.ShapeDtypeStruct((Bp, Tc, NCP), jnp.float32),   # fix_scale (cropped T)
        jax.ShapeDtypeStruct((Bp, Tc, NCP), jnp.float32),   # time_att (cropped T)
    )
    grid_spec = pltpu.PrefetchScalarGridSpec(
        num_scalar_prefetch=0,
        grid=(G,),
        in_specs=[
            pl.BlockSpec(memory_space=pltpu.MemorySpace.SMEM),      # p (scalar)
            pl.BlockSpec((BB, Tc, F_, C), lambda b: (b, 0, 0, 0)),  # x slab (cropped)
            pl.BlockSpec((C, HIDDEN), lambda b: (0, 0)),            # w1 (bf16)
            pl.BlockSpec((1, HIDDEN), lambda b: (0, 0)),            # b1
            pl.BlockSpec((HIDDEN, NCAT), lambda b: (0, 0)),         # wa|wf fused (bf16)
            pl.BlockSpec((1, NCAT), lambda b: (0, 0)),              # ba|bf fused
        ],
        out_specs=(
            pl.BlockSpec((1, BB, NCAT), lambda b: (b, 0, 0)),
            pl.BlockSpec((BB, Tc, NCP), lambda b: (b, 0, 0)),
            pl.BlockSpec((BB, Tc, NCP), lambda b: (b, 0, 0)),
        ),
    )
    lc3, fs_c, tatt_c = pl.pallas_call(
        kernel,
        out_shape=out_shape,
        grid_spec=grid_spec,
        compiler_params=pltpu.CompilerParams(
            dimension_semantics=("parallel",)),             # batch steps shard across TCs
    )(p, x, w1_bf, b1, wcat, bcat)

    # strip class / batch padding (layout plumbing only; crop already applied)
    lc = lc3.reshape(Bp, NCAT)
    logits = lc[:B, :nc]
    clipwise = lc[:B, NCP:NCP + nc]
    fs_out = fs_c[:B, :, :nc]
    tatt_out = tatt_c[:B, :, :nc]
    return logits, clipwise, fs_out, tatt_out


def atthead_ref(x_nchw, params, train_period=15.0, infer_period=5.0):
    """Pure-JAX f32 reference (mirrors the PyTorch eval-mode forward)."""
    p, w1, b1, wa, ba, wf, bf = params
    B, C, F_, T = x_nchw.shape
    start, end = _crop_bounds(T, train_period, infer_period)
    pv = p[0]
    pooled = jnp.mean(jnp.maximum(x_nchw, EPS) ** pv, axis=2) ** (1.0 / pv)  # (B, C, T)
    h = jnp.transpose(pooled, (0, 2, 1))                                     # (B, T, C)
    h = jnp.maximum(h @ w1 + b1, 0.0)                                        # (B, T, 512)
    ta = jnp.tanh(jnp.einsum('bth,hn->btn', h, wa) + ba)                     # (B, T, nc)
    hc = h[:, start:end]
    tac = ta[:, start:end]
    fs = jnp.einsum('bth,hn->btn', hc, wf) + bf                              # (B, Tc, nc)
    att = jax.nn.softmax(tac, axis=1)                                        # softmax over time
    clip = jnp.sum(jax.nn.sigmoid(fs) * att, axis=1)
    logits = jnp.sum(fs * att, axis=1)
    return logits, clip, fs, tac


if __name__ == "__main__":
    key = jax.random.PRNGKey(0)
    kx, kp = jax.random.split(key)

    B, C, F_, T = 2, 16, 8, 12           # NCHW-style backbone feature map
    NUM_CLASS = 397                      # AttHead default

    x = jax.random.normal(kx, (B, C, F_, T), jnp.float32)
    params = make_atthead_params(kp, C, NUM_CLASS)

    outs = jax.block_until_ready(atthead_forward(x, params))
    refs = jax.block_until_ready(atthead_ref(x, params))

    # bf16 matmuls + approx reciprocal in the kernel vs. f32 reference
    for o, r in zip(outs, refs):
        np.testing.assert_allclose(np.asarray(o), np.asarray(r), rtol=2e-2, atol=2e-2)

    print("KERNEL_OK")
</pallas_src>

<mosaic_0001>
module attributes {stable_mosaic.version = 11 : i64} {
  func.func @kernel(%arg0: i32, %arg1: memref<1xf32, #tpu.memory_space<smem>>, %arg2: memref<2x4x8x16xf32, #tpu.memory_space<vmem>>, %arg3: memref<16x512xbf16, #tpu.memory_space<vmem>>, %arg4: memref<1x512xf32, #tpu.memory_space<vmem>>, %arg5: memref<512x1024xbf16, #tpu.memory_space<vmem>>, %arg6: memref<1x1024xf32, #tpu.memory_space<vmem>>, %arg7: memref<1x2x1024xf32, #tpu.memory_space<vmem>>, %arg8: memref<2x4x512xf32, #tpu.memory_space<vmem>>, %arg9: memref<2x4x512xf32, #tpu.memory_space<vmem>>) attributes {dimension_semantics = [#tpu.dimension_semantics<parallel>], iteration_bounds = array<i64: 1>, scalar_prefetch = 0 : i64, scratch_operands = 0 : i64, tpu.core_type = #tpu.core_type<tc>, window_params = [{transform_indices = @transform_0, window_bounds = array<i64: 1>}, {transform_indices = @transform_1, window_bounds = array<i64: 2, 4, 8, 16>}, {pipeline_mode = #tpu.pipeline_mode<synchronous>, transform_indices = @transform_2, window_bounds = array<i64: 16, 512>}, {pipeline_mode = #tpu.pipeline_mode<synchronous>, transform_indices = @transform_3, window_bounds = array<i64: 1, 512>}, {pipeline_mode = #tpu.pipeline_mode<synchronous>, transform_indices = @transform_4, window_bounds = array<i64: 512, 1024>}, {pipeline_mode = #tpu.pipeline_mode<synchronous>, transform_indices = @transform_5, window_bounds = array<i64: 1, 1024>}, {transform_indices = @transform_6, window_bounds = array<i64: 1, 2, 1024>}, {transform_indices = @transform_7, window_bounds = array<i64: 2, 4, 512>}, {transform_indices = @transform_8, window_bounds = array<i64: 2, 4, 512>}]} {
    %c0 = arith.constant 0 : index
    %0 = memref.load %arg1[%c0] : memref<1xf32, #tpu.memory_space<smem>>
    %cst = arith.constant 1.000000e+00 : f32
    %1 = arith.divf %cst, %0 : f32
    %c0_0 = arith.constant 0 : index
    %c0_1 = arith.constant 0 : index
    %c0_2 = arith.constant 0 : index
    %c0_3 = arith.constant 0 : index
    %2 = vector.load %arg2[%c0_0, %c0_1, %c0_2, %c0_3] : memref<2x4x8x16xf32, #tpu.memory_space<vmem>>, vector<2x4x8x16xf32>
    %3 = vector.shape_cast %2 : vector<2x4x8x16xf32> to vector<8x8x16xf32>
    %cst_4 = arith.constant 9.99999997E-7 : f32
    %4 = vector.broadcast %cst_4 : f32 to vector<8x8x16xf32>
    %5 = arith.maximumf %3, %4 : vector<8x8x16xf32>
    %6 = vector.broadcast %0 : f32 to vector<8x8x16xf32>
    %7 = math.powf %5, %6 : vector<8x8x16xf32>
    %cst_5 = arith.constant dense<0.000000e+00> : vector<8x16xf32>
    %8 = vector.multi_reduction <add>, %7, %cst_5 [1] : vector<8x8x16xf32> to vector<8x16xf32>
    %cst_6 = arith.constant 8.000000e+00 : f32
    %9 = vector.broadcast %cst_6 : f32 to vector<8x16xf32>
    %10 = arith.divf %8, %9 : vector<8x16xf32>
    %11 = vector.broadcast %1 : f32 to vector<8x16xf32>
    %12 = math.powf %10, %11 : vector<8x16xf32>
    %13 = arith.truncf %12 : vector<8x16xf32> to vector<8x16xbf16>
    %c0_7 = arith.constant 0 : index
    %c0_8 = arith.constant 0 : index
    %14 = vector.load %arg3[%c0_7, %c0_8] : memref<16x512xbf16, #tpu.memory_space<vmem>>, vector<16x512xbf16>
    %cst_9 = arith.constant dense<0.000000e+00> : vector<8x512xf32>
    %15 = tpu.matmul %13, %14, %cst_9 {dimension_numbers = #tpu.dot_dimension_numbers<[1], [0], [0], [1], [0, 0, 1, 1], [], []>} : vector<8x16xbf16>, vector<16x512xbf16>, vector<8x512xf32> -> vector<8x512xf32>
    %c0_10 = arith.constant 0 : index
    %c0_11 = arith.constant 0 : index
    %16 = vector.load %arg4[%c0_10, %c0_11] : memref<1x512xf32, #tpu.memory_space<vmem>>, vector<1x512xf32>
    %17 = vector.broadcast %16 : vector<1x512xf32> to vector<8x512xf32>
    %18 = arith.addf %15, %17 : vector<8x512xf32>
    %cst_12 = arith.constant 0.000000e+00 : f32
    %19 = vector.broadcast %cst_12 : f32 to vector<8x512xf32>
    %20 = arith.maximumf %18, %19 : vector<8x512xf32>
    %21 = arith.truncf %20 : vector<8x512xf32> to vector<8x512xbf16>
    %c0_13 = arith.constant 0 : index
    %c0_14 = arith.constant 0 : index
    %22 = vector.load %arg5[%c0_13, %c0_14] : memref<512x1024xbf16, #tpu.memory_space<vmem>>, vector<512x1024xbf16>
    %cst_15 = arith.constant dense<0.000000e+00> : vector<8x1024xf32>
    %23 = tpu.matmul %21, %22, %cst_15 {dimension_numbers = #tpu.dot_dimension_numbers<[1], [0], [0], [1], [0, 0, 1, 1], [], []>} : vector<8x512xbf16>, vector<512x1024xbf16>, vector<8x1024xf32> -> vector<8x1024xf32>
    %c0_16 = arith.constant 0 : index
    %c0_17 = arith.constant 0 : index
    %24 = vector.load %arg6[%c0_16, %c0_17] : memref<1x1024xf32, #tpu.memory_space<vmem>>, vector<1x1024xf32>
    %25 = vector.broadcast %24 : vector<1x1024xf32> to vector<8x1024xf32>
    %26 = arith.addf %23, %25 : vector<8x1024xf32>
    %27 = vector.extract_strided_slice %26 {offsets = [0, 0], sizes = [8, 512], strides = [1, 1]} : vector<8x1024xf32> to vector<8x512xf32>
    %28 = math.tanh %27 : vector<8x512xf32>
    %29 = vector.shape_cast %28 : vector<8x512xf32> to vector<2x4x512xf32>
    %30 = vector.extract_strided_slice %26 {offsets = [0, 512], sizes = [8, 512], strides = [1, 1]} : vector<8x1024xf32> to vector<8x512xf32>
    %31 = vector.shape_cast %30 : vector<8x512xf32> to vector<2x4x512xf32>
    %cst_18 = arith.constant dense<0xFF800000> : vector<2x512xf32>
    %32 = vector.multi_reduction <maximumf>, %29, %cst_18 [1] : vector<2x4x512xf32> to vector<2x512xf32>
    %33 = vector.shape_cast %32 : vector<2x512xf32> to vector<2x1x512xf32>
    %34 = vector.broadcast %33 : vector<2x1x512xf32> to vector<2x4x512xf32>
    %35 = arith.subf %29, %34 : vector<2x4x512xf32>
    %36 = math.exp %35 : vector<2x4x512xf32>
    %cst_19 = arith.constant dense<0.000000e+00> : vector<2x512xf32>
    %37 = vector.multi_reduction <add>, %36, %cst_19 [1] : vector<2x4x512xf32> to vector<2x512xf32>
    %38 = vector.shape_cast %37 : vector<2x512xf32> to vector<2x1x512xf32>
    %39 = tpu.reciprocal %38 {approx = true} : vector<2x1x512xf32> -> vector<2x1x512xf32>
    %40 = vector.broadcast %39 : vector<2x1x512xf32> to vector<2x4x512xf32>
    %41 = arith.mulf %36, %40 : vector<2x4x512xf32>
    %42 = arith.mulf %31, %41 : vector<2x4x512xf32>
    %cst_20 = arith.constant dense<0.000000e+00> : vector<2x512xf32>
    %43 = vector.multi_reduction <add>, %42, %cst_20 [1] : vector<2x4x512xf32> to vector<2x512xf32>
    %44 = arith.negf %31 : vector<2x4x512xf32>
    %45 = math.exp %44 : vector<2x4x512xf32>
    %cst_21 = arith.constant 1.000000e+00 : f32
    %46 = vector.broadcast %cst_21 : f32 to vector<2x4x512xf32>
    %47 = arith.addf %46, %45 : vector<2x4x512xf32>
    %48 = arith.divf %46, %47 : vector<2x4x512xf32>
    %49 = arith.mulf %48, %41 : vector<2x4x512xf32>
    %cst_22 = arith.constant dense<0.000000e+00> : vector<2x512xf32>
    %50 = vector.multi_reduction <add>, %49, %cst_22 [1] : vector<2x4x512xf32> to vector<2x512xf32>
    %51 = tpu.concatenate %43, %50 in 1 : vector<2x512xf32>, vector<2x512xf32> -> vector<2x1024xf32>
    %52 = vector.shape_cast %51 : vector<2x1024xf32> to vector<1x2x1024xf32>
    %c0_23 = arith.constant 0 : index
    %c0_24 = arith.constant 0 : index
    %c0_25 = arith.constant 0 : index
    %53 = vector.load %arg7[%c0_23, %c0_24, %c0_25] : memref<1x2x1024xf32, #tpu.memory_space<vmem>>, vector<1x2x1024xf32>
    tpu.vector_store %arg7[%c0_23, %c0_24, %c0_25], %52 {strides = array<i32>} : memref<1x2x1024xf32, #tpu.memory_space<vmem>>, vector<1x2x1024xf32>,
    %c0_26 = arith.constant 0 : index
    %c0_27 = arith.constant 0 : index
    %c0_28 = arith.constant 0 : index
    %54 = vector.load %arg8[%c0_26, %c0_27, %c0_28] : memref<2x4x512xf32, #tpu.memory_space<vmem>>, vector<2x4x512xf32>
    tpu.vector_store %arg8[%c0_26, %c0_27, %c0_28], %31 {strides = array<i32>} : memref<2x4x512xf32, #tpu.memory_space<vmem>>, vector<2x4x512xf32>,
    %c0_29 = arith.constant 0 : index
    %c0_30 = arith.constant 0 : index
    %c0_31 = arith.constant 0 : index
    %55 = vector.load %arg9[%c0_29, %c0_30, %c0_31] : memref<2x4x512xf32, #tpu.memory_space<vmem>>, vector<2x4x512xf32>
    tpu.vector_store %arg9[%c0_29, %c0_30, %c0_31], %29 {strides = array<i32>} : memref<2x4x512xf32, #tpu.memory_space<vmem>>, vector<2x4x512xf32>,
    return
  }
  func.func @transform_0(%arg0: i32) -> i32 {
    %c0_i32 = arith.constant 0 : i32
    %c0_i32_0 = arith.constant 0 : i32
    return %c0_i32 : i32
  }
  func.func @transform_1(%arg0: i32) -> (i32, i32, i32, i32) {
    %c0_i32 = arith.constant 0 : i32
    %c0_i32_0 = arith.constant 0 : i32
    %c0_i32_1 = arith.constant 0 : i32
    %c0_i32_2 = arith.constant 0 : i32
    return %arg0, %c0_i32, %c0_i32_0, %c0_i32_1 : i32, i32, i32, i32
  }
  func.func @transform_2(%arg0: i32) -> (i32, i32) {
    %c0_i32 = arith.constant 0 : i32
    %c0_i32_0 = arith.constant 0 : i32
    %c0_i32_1 = arith.constant 0 : i32
    return %c0_i32, %c0_i32_0 : i32, i32
  }
  func.func @transform_3(%arg0: i32) -> (i32, i32) {
    %c0_i32 = arith.constant 0 : i32
    %c0_i32_0 = arith.constant 0 : i32
    %c0_i32_1 = arith.constant 0 : i32
    return %c0_i32, %c0_i32_0 : i32, i32
  }
  func.func @transform_4(%arg0: i32) -> (i32, i32) {
    %c0_i32 = arith.constant 0 : i32
    %c0_i32_0 = arith.constant 0 : i32
    %c0_i32_1 = arith.constant 0 : i32
    return %c0_i32, %c0_i32_0 : i32, i32
  }
  func.func @transform_5(%arg0: i32) -> (i32, i32) {
    %c0_i32 = arith.constant 0 : i32
    %c0_i32_0 = arith.constant 0 : i32
    %c0_i32_1 = arith.constant 0 : i32
    return %c0_i32, %c0_i32_0 : i32, i32
  }
  func.func @transform_6(%arg0: i32) -> (i32, i32, i32) {
    %c0_i32 = arith.constant 0 : i32
    %c0_i32_0 = arith.constant 0 : i32
    %c0_i32_1 = arith.constant 0 : i32
    return %arg0, %c0_i32, %c0_i32_0 : i32, i32, i32
  }
  func.func @transform_7(%arg0: i32) -> (i32, i32, i32) {
    %c0_i32 = arith.constant 0 : i32
    %c0_i32_0 = arith.constant 0 : i32
    %c0_i32_1 = arith.constant 0 : i32
    return %arg0, %c0_i32, %c0_i32_0 : i32, i32, i32
  }
  func.func @transform_8(%arg0: i32) -> (i32, i32, i32) {
    %c0_i32 = arith.constant 0 : i32
    %c0_i32_0 = arith.constant 0 : i32
    %c0_i32_1 = arith.constant 0 : i32
    return %arg0, %c0_i32, %c0_i32_0 : i32, i32, i32
  }
}

</mosaic_0001>

<llo_original>
// kernel: tpu_custom_call.1
$region0: #{tpu_custom_call.1}
  #allocation0 [shape = 'u32[]', space=smem, size = 0x4, offset = 0x4, fixed_abs, tag = 'smem constant byte address 0x4 - core index']
  #allocation1 [shape = 'u32[144,128]{1,0:T(1,128)}', space=vmem, size = 0x12000, scoped, tag = 'internal scratch']
  #allocation2 [shape = 'f32[1]{0:T(128)S(6)}', space=smem, size = 0x200, scoped, tag = 'scoped memory for tpu_custom_call.1']
  %s0 = inlined_call_operand.<no memory space> [shape: f32[1], index: 0, kind: input, shape index: {}]
  %s1 = inlined_call_operand.hbm [shape: f32[2,4,8,16], index: 1, kind: input, shape index: {}]
  %s2 = inlined_call_operand.hbm [shape: bf16[16,512], index: 2, kind: input, shape index: {}]
  %s3 = inlined_call_operand.vmem [shape: f32[1,512], index: 3, kind: input, shape index: {}]
  %s4 = inlined_call_operand.hbm [shape: bf16[512,1024], index: 4, kind: input, shape index: {}]
  %s5 = inlined_call_operand.vmem [shape: f32[1,1024], index: 5, kind: input, shape index: {}]
  %s6 = inlined_call_operand.hbm [shape: f32[1,2,1024], index: 6, kind: output, shape index: {0}]
  %s7 = inlined_call_operand.hbm [shape: f32[2,4,512], index: 7, kind: output, shape index: {1}]
  %s8 = inlined_call_operand.hbm [shape: f32[2,4,512], index: 8, kind: output, shape index: {2}]
  %9 = xla_tuple %s6, %s7, %s8
  %s10 = sld [smem:[#allocation0]]
  $region62: #{tpu_custom_call.1} parent=0
    _
  %s12 = ssub.s32 1, %s10
  %s13 = scalar_select 0, %s12, %s10
  %14 = sst [smem:[#allocation2]] %s0
  $region1: #{tpu_custom_call.1} parent=0
    #allocation3 [shape = 'u8[32768]{0}', space=vmem, size = 0x8000, scoped, tag = 'input window, operand 1, single buffered']
    #allocation4 [shape = 's32[1]{0}', space=sflag, size = 0x4, scoped, tag = 'scoped memory for tpu_custom_call.1']
    #allocation5 [shape = 's32[1]{0}', space=sflag, size = 0x4, scoped, tag = 'scoped memory for tpu_custom_call.1']
    #allocation6 [shape = 'u8[16384]{0}', space=vmem, size = 0x4000, scoped, tag = 'input window, operand 2, single buffered']
    #allocation7 [shape = 's32[1]{0}', space=sflag, size = 0x4, scoped, tag = 'scoped memory for tpu_custom_call.1']
    #allocation8 [shape = 'u8[1048576]{0}', space=vmem, size = 0x100000, scoped, tag = 'input window, operand 4, single buffered']
    #allocation9 [shape = 'u8[8192]{0}', space=vmem, size = 0x2000, scoped, tag = 'output window, operand 0, single buffered']
    #allocation10 [shape = 'u8[16384]{0}', space=vmem, size = 0x4000, scoped, tag = 'output window, operand 1, single buffered']
    #allocation11 [shape = 's32[1]{0}', space=sflag, size = 0x4, scoped, tag = 'scoped memory for tpu_custom_call.1']
    #allocation12 [shape = 'u8[16384]{0}', space=vmem, size = 0x4000, scoped, tag = 'output window, operand 2, single buffered']
    %15 = vsyncpa [#allocation4], 0
    %16 = vsyncpa [#allocation7], 0
    %17 = vsyncpa [#allocation5], 0
    %18 = vsyncpa [#allocation11], 0
    // Predicated region
    $region2: #{tpu_custom_call.1} parent=1 // pred_check
      _
    $region3: #{tpu_custom_call.1} parent=1 // pred_check_branch
      %20 = sbr.rel (0) target = $region5
    $region4: #{tpu_custom_call.1} parent=1 // pred_region
      _
    $region5: #{tpu_custom_call.1} parent=1 // pred_fallthru
      _
    // Predicated region
    $region6: #{tpu_custom_call.1} parent=1 // pred_check
      _
    $region7: #{tpu_custom_call.1} parent=1 // pred_check_branch
      %22 = sbr.rel (0) target = $region9
    $region8: #{tpu_custom_call.1} parent=1 // pred_region
      %s24 = ssub.s32 1024, 1024
      %25 = vsyncadd [#allocation4], %s24
      %s26 = sshll.u32 [#allocation3], 4
      %s27 = int_to_ptr.vmem [resolvable:$true] %s26
      %32 = dma.hbm_to_vmem [thread:$0]  %s1, 1024, %s27, [#allocation4], 128, 128, 8
    $region9: #{tpu_custom_call.1} parent=1 // pred_fallthru
      _
    // Predicated region
    $region10: #{tpu_custom_call.1} parent=1 // pred_check
      _
    $region11: #{tpu_custom_call.1} parent=1 // pred_check_branch
      %34 = sbr.rel (0) target = $region13
    $region12: #{tpu_custom_call.1} parent=1 // pred_region
      %s36 = ssub.s32 512, 512
      %37 = vsyncadd [#allocation7], %s36
      %s38 = sshll.u32 [#allocation6], 4
      %s39 = int_to_ptr.vmem [resolvable:$true] %s38
      %44 = dma.hbm_to_vmem [thread:$0]  %s2, 512, %s39, [#allocation7], 256, 256, 16
    $region13: #{tpu_custom_call.1} parent=1 // pred_fallthru
      _
    // Predicated region
    $region14: #{tpu_custom_call.1} parent=1 // pred_check
      _
    $region15: #{tpu_custom_call.1} parent=1 // pred_check_branch
      %46 = sbr.rel (0) target = $region17
    $region16: #{tpu_custom_call.1} parent=1 // pred_region
      _
    $region17: #{tpu_custom_call.1} parent=1 // pred_fallthru
      _
    // Predicated region
    $region18: #{tpu_custom_call.1} parent=1 // pred_check
      _
    $region19: #{tpu_custom_call.1} parent=1 // pred_check_branch
      %48 = sbr.rel (0) target = $region21
    $region20: #{tpu_custom_call.1} parent=1 // pred_region
      %s50 = ssub.s32 32768, 32768
      %51 = vsyncadd [#allocation7], %s50
      %s52 = sshll.u32 [#allocation8], 4
      %s53 = int_to_ptr.vmem [resolvable:$true] %s52
      %58 = dma.hbm_to_vmem [thread:$0]  %s4, 32768, %s53, [#allocation7], 512, 512, 32
    $region21: #{tpu_custom_call.1} parent=1 // pred_fallthru
      _
    // Predicated region
    $region22: #{tpu_custom_call.1} parent=1 // pred_check
      _
    $region23: #{tpu_custom_call.1} parent=1 // pred_check_branch
      %60 = sbr.rel (0) target = $region25
    $region24: #{tpu_custom_call.1} parent=1 // pred_region
      _
    $region25: #{tpu_custom_call.1} parent=1 // pred_fallthru
      _
    // Predicated region
    $region26: #{tpu_custom_call.1} parent=1 // pred_check
      _
    $region27: #{tpu_custom_call.1} parent=1 // pred_check_branch
      %62 = sbr.rel (0) target = $region29
    $region28: #{tpu_custom_call.1} parent=1 // pred_region
      %63 = dma.done [#allocation4], 1024
    $region29: #{tpu_custom_call.1} parent=1 // pred_fallthru
      _
    // Predicated region
    $region30: #{tpu_custom_call.1} parent=1 // pred_check
      _
    $region31: #{tpu_custom_call.1} parent=1 // pred_check_branch
      %65 = sbr.rel (0) target = $region33
    $region32: #{tpu_custom_call.1} parent=1 // pred_region
      %66 = dma.done [#allocation7], 512
    $region33: #{tpu_custom_call.1} parent=1 // pred_fallthru
      _
    // Predicated region
    $region34: #{tpu_custom_call.1} parent=1 // pred_check
      _
    $region35: #{tpu_custom_call.1} parent=1 // pred_check_branch
      %68 = sbr.rel (0) target = $region37
    $region36: #{tpu_custom_call.1} parent=1 // pred_region
      %69 = dma.done [#allocation7], 32768
    $region37: #{tpu_custom_call.1} parent=1 // pred_fallthru
      _
    %s71 = sld [smem:[#allocation2]]
    %v72 = vstv %s71
    %v73 = vrcp.pop %v72
    %s74 = vtos %v73
    %v75 = vld [vmem:[#allocation3] sm:$0xff]
    %v76 = vld [vmem:[#allocation3 + $0x8] sm:$0xff]
    %v77 = vld [vmem:[#allocation3 + $0x10] sm:$0xff]
    %v78 = vld [vmem:[#allocation3 + $0x18] sm:$0xff]
    %v79 = vld [vmem:[#allocation3 + $0x20] sm:$0xff]
    %v80 = vld [vmem:[#allocation3 + $0x28] sm:$0xff]
    %v81 = vld [vmem:[#allocation3 + $0x30] sm:$0xff]
    %v82 = vld [vmem:[#allocation3 + $0x38] sm:$0xff]
    %v83 = vmax.f32 %v75, 1e-06
    %v84 = vmax.f32 %v76, 1e-06
    %v85 = vmax.f32 %v77, 1e-06
    %v86 = vmax.f32 %v78, 1e-06
    %v87 = vmax.f32 %v79, 1e-06
    %v88 = vmax.f32 %v80, 1e-06
    %v89 = vmax.f32 %v81, 1e-06
    %v90 = vmax.f32 %v82, 1e-06
    %v91 = vstv %s71
    %v92 = vpow.f32 %v83, %v91
    %v93 = vpow.f32 %v84, %v91
    %v94 = vpow.f32 %v85, %v91
    %v95 = vpow.f32 %v86, %v91
    %v96 = vpow.f32 %v87, %v91
    %v97 = vpow.f32 %v88, %v91
    %v98 = vpow.f32 %v89, %v91
    %v99 = vpow.f32 %v90, %v91
    %vm100 = vcmask 130048
    %v101 = vsel %vm100, %v92, 0.0
    %v102 = vrot.slane %v101, 4
    %v103 = vadd.f32 %v101, %v102
    %v104 = vrot.slane %v103, 2
    %v105 = vadd.f32 %v103, %v104
    %v106 = vrot.slane %v105, 1
    %v107 = vadd.f32 %v105, %v106
    %v108 = vsel %vm100, %v93, 0.0
    %v109 = vrot.slane %v108, 4
    %v110 = vadd.f32 %v108, %v109
    %v111 = vrot.slane %v110, 2
    %v112 = vadd.f32 %v110, %v111
    %v113 = vrot.slane %v112, 1
    %v114 = vadd.f32 %v112, %v113
    %v115 = vsel %vm100, %v94, 0.0
    %v116 = vrot.slane %v115, 4
    %v117 = vadd.f32 %v115, %v116
    %v118 = vrot.slane %v117, 2
    %v119 = vadd.f32 %v117, %v118
    %v120 = vrot.slane %v119, 1
    %v121 = vadd.f32 %v119, %v120
    %v122 = vsel %vm100, %v95, 0.0
    %v123 = vrot.slane %v122, 4
    %v124 = vadd.f32 %v122, %v123
    %v125 = vrot.slane %v124, 2
    %v126 = vadd.f32 %v124, %v125
    %v127 = vrot.slane %v126, 1
    %v128 = vadd.f32 %v126, %v127
    %v129 = vsel %vm100, %v96, 0.0
    %v130 = vrot.slane %v129, 4
    %v131 = vadd.f32 %v129, %v130
    %v132 = vrot.slane %v131, 2
    %v133 = vadd.f32 %v131, %v132
    %v134 = vrot.slane %v133, 1
    %v135 = vadd.f32 %v133, %v134
    %v136 = vsel %vm100, %v97, 0.0
    %v137 = vrot.slane %v136, 4
    %v138 = vadd.f32 %v136, %v137
    %v139 = vrot.slane %v138, 2
    %v140 = vadd.f32 %v138, %v139
    %v141 = vrot.slane %v140, 1
    %v142 = vadd.f32 %v140, %v141
    %v143 = vsel %vm100, %v98, 0.0
    %v144 = vrot.slane %v143, 4
    %v145 = vadd.f32 %v143, %v144
    %v146 = vrot.slane %v145, 2
    %v147 = vadd.f32 %v145, %v146
    %v148 = vrot.slane %v147, 1
    %v149 = vadd.f32 %v147, %v148
    %v150 = vsel %vm100, %v99, 0.0
    %v151 = vrot.slane %v150, 4
    %v152 = vadd.f32 %v150, %v151
    %v153 = vrot.slane %v152, 2
    %v154 = vadd.f32 %v152, %v153
    %v155 = vrot.slane %v154, 1
    %v156 = vadd.f32 %v154, %v155
    %v157 = vrcp.pop 8.0
    %v158 = vmul.f32 %v107, %v157
    %v159 = vmul.f32 %v114, %v157
    %v160 = vmul.f32 %v121, %v157
    %v161 = vmul.f32 %v128, %v157
    %v162 = vmul.f32 %v135, %v157
    %v163 = vmul.f32 %v142, %v157
    %v164 = vmul.f32 %v149, %v157
    %v165 = vmul.f32 %v156, %v157
    %v166 = vstv %s74
    %v167 = vpow.f32 %v158, %v166
    %v168 = vpow.f32 %v159, %v166
    %v169 = vpow.f32 %v160, %v166
    %v170 = vpow.f32 %v161, %v166
    %v171 = vpow.f32 %v162, %v166
    %v172 = vpow.f32 %v163, %v166
    %v173 = vpow.f32 %v164, %v166
    %v174 = vpow.f32 %v165, %v166
    %v175 = vpack.c.bf16 %v167, %v167
    %v176 = vpack.c.bf16 %v168, %v168
    %v177 = vpack.c.bf16 %v169, %v169
    %v178 = vpack.c.bf16 %v170, %v170
    %v179 = vpack.c.bf16 %v171, %v171
    %v180 = vpack.c.bf16 %v172, %v172
    %v181 = vpack.c.bf16 %v173, %v173
    %v182 = vpack.c.bf16 %v174, %v174
    %v183 = vld [vmem:[#allocation6] sm:$0xff]
    %v184 = vld [vmem:[#allocation6 + $0x8] sm:$0xff]
    %v185 = vld [vmem:[#allocation6 + $0x10] sm:$0xff]
    %v186 = vld [vmem:[#allocation6 + $0x18] sm:$0xff]
    %v187 = vld [vmem:[%s3] sm:$0xf]
    %v189 = vlaneseq
    %v190 = vshrl.u32 %v189, 7
    %v191 = vsub.s32 0, %v190
    %v192 = vrot.slane %v187, %v191
    %v193 = vlaneseq
    %v194 = vshrl.u32 %v193, 7
    %v195 = vsub.s32 1, %v194
    %v196 = vrot.slane %v187, %v195
    %v197 = vlaneseq
    %v198 = vshrl.u32 %v197, 7
    %v199 = vsub.s32 2, %v198
    %v200 = vrot.slane %v187, %v199
    %v201 = vlaneseq
    %v202 = vshrl.u32 %v201, 7
    %v203 = vsub.s32 3, %v202
    %v204 = vrot.slane %v187, %v203
    %v217 = vunpack.c.l.b16 %v175
    %v218 = vunpack.c.l.b16 %v176
    %v219 = vunpack.c.l.b16 %v177
    %v220 = vunpack.c.l.b16 %v178
    %v221 = vunpack.c.l.b16 %v179
    %v222 = vunpack.c.l.b16 %v180
    %v223 = vunpack.c.l.b16 %v181
    %v224 = vunpack.c.l.b16 %v182
    %vm225 = vcmask 1041409
    %v226 = vsel %vm225, %v218, %v217
    %vm227 = vcmask 1042434
    %v228 = vsel %vm227, %v219, %v226
    %vm229 = vcmask 1043459
    %v230 = vsel %vm229, %v220, %v228
    %vm231 = vcmask 1044484
    %v232 = vsel %vm231, %v221, %v230
    %vm233 = vcmask 1045509
    %v234 = vsel %vm233, %v222, %v232
    %vm235 = vcmask 1046534
    %v236 = vsel %vm235, %v223, %v234
    %vm237 = vcmask 1047559
    %v238 = vsel %vm237, %v224, %v236
    %v239 = vpack.c.b16 %v238, %v238
    %v244 = vunpack.c.l.b16 %v183
    %v245 = vunpack.c.h.b16 %v183
    %v246 = vunpack.c.l.b16 %v184
    %v247 = vunpack.c.h.b16 %v184
    %v248 = vunpack.c.l.b16 %v185
    %v249 = vunpack.c.h.b16 %v185
    %v250 = vunpack.c.l.b16 %v186
    %v251 = vunpack.c.h.b16 %v186
    %v252 = vpack.c.b16 %v248, %v244
    %v253 = vpack.c.b16 %v249, %v245
    %v254 = vpack.c.b16 %v250, %v246
    %v255 = vpack.c.b16 %v251, %v247
    %v261 = vsel %vm100, %v239, 0
    %263 = vmatprep.subr.bf16.mxu0 %v253
    %264 = vmatpush1.bf16.msra.mxu0 %v252
    %265 = vmatprep.subr.bf16.mxu0 0
    %266 = vmatpush1.bf16.msra.mxu0 0
    %267 = vmatprep.subr.bf16.mxu0 0
    %268 = vmatpush1.bf16.msra.mxu0 0
    %269 = vmatprep.subr.bf16.mxu0 0
    %270 = vmatpush1.bf16.msra.mxu0 0
    %271 = vmatprep.subr.bf16.mxu0 0
    %272 = vmatpush1.bf16.msra.mxu0 0
    %273 = vmatprep.subr.bf16.mxu0 0
    %274 = vmatpush1.bf16.msra.mxu0 0
    %275 = vmatprep.subr.bf16.mxu0 0
    %276 = vmatpush1.bf16.msra.mxu0 0
    %277 = vmatprep.subr.bf16.mxu0 0
    %278 = vmatpush1.bf16.msra.mxu0 0
    %279 = vmatprep.subr.bf16.mxu0 0
    %280 = vmatpush1.bf16.msra.mxu0 0
    %281 = vmatprep.subr.bf16.mxu0 0
    %282 = vmatpush1.bf16.msra.mxu0 0
    %283 = vmatprep.subr.bf16.mxu0 0
    %284 = vmatpush1.bf16.msra.mxu0 0
    %285 = vmatprep.subr.bf16.mxu0 0
    %286 = vmatpush1.bf16.msra.mxu0 0
    %287 = vmatprep.subr.bf16.mxu0 0
    %288 = vmatpush1.bf16.msra.mxu0 0
    %289 = vmatprep.subr.bf16.mxu0 0
    %290 = vmatpush1.bf16.msra.mxu0 0
    %291 = vmatprep.subr.bf16.mxu0 0
    %292 = vmatpush1.bf16.msra.mxu0 0
    %293 = vmatprep.subr.bf16.mxu0 0
    %294 = vmatpush1.bf16.msra.mxu0 0
    %295 = vmatprep.mubr.bf16.mxu0 0
    %296 = vmatmul.mubr.bf16.gmra.mrb[0].mxu0 %v261
    %v297 = vpop.f32.mrb[0].mxu0
    %v298 = vadd.f32 %v192, %v297
    %v299 = vpop.f32.mrb[0].mxu0
    %v300 = vadd.f32 %v196, %v299
    %v301 = vpop.f32.mrb[0].mxu0
    %v302 = vpop.f32.mrb[0].mxu0
    %303 = vdwg.mxu0
    %304 = vmatprep.subr.bf16.mxu0 %v255
    %305 = vmatpush1.bf16.msra.mxu0 %v254
    %306 = vmatprep.subr.bf16.mxu0 0
    %307 = vmatpush1.bf16.msra.mxu0 0
    %308 = vmatprep.subr.bf16.mxu0 0
    %309 = vmatpush1.bf16.msra.mxu0 0
    %310 = vmatprep.subr.bf16.mxu0 0
    %311 = vmatpush1.bf16.msra.mxu0 0
    %312 = vmatprep.subr.bf16.mxu0 0
    %313 = vmatpush1.bf16.msra.mxu0 0
    %314 = vmatprep.subr.bf16.mxu0 0
    %315 = vmatpush1.bf16.msra.mxu0 0
    %316 = vmatprep.subr.bf16.mxu0 0
    %317 = vmatpush1.bf16.msra.mxu0 0
    %318 = vmatprep.subr.bf16.mxu0 0
    %319 = vmatpush1.bf16.msra.mxu0 0
    %320 = vmatprep.subr.bf16.mxu0 0
    %321 = vmatpush1.bf16.msra.mxu0 0
    %322 = vmatprep.subr.bf16.mxu0 0
    %323 = vmatpush1.bf16.msra.mxu0 0
    %324 = vmatprep.subr.bf16.mxu0 0
    %325 = vmatpush1.bf16.msra.mxu0 0
    %326 = vmatprep.subr.bf16.mxu0 0
    %327 = vmatpush1.bf16.msra.mxu0 0
    %328 = vmatprep.subr.bf16.mxu0 0
    %329 = vmatpush1.bf16.msra.mxu0 0
    %330 = vmatprep.subr.bf16.mxu0 0
    %331 = vmatpush1.bf16.msra.mxu0 0
    %332 = vmatprep.subr.bf16.mxu0 0
    %333 = vmatpush1.bf16.msra.mxu0 0
    %334 = vmatprep.subr.bf16.mxu0 0
    %335 = vmatpush1.bf16.msra.mxu0 0
    %336 = vmatprep.mubr.bf16.mxu0 0
    %337 = vmatmul.mubr.bf16.gmra.mrb[0].mxu0 %v261
    %v338 = vpop.f32.mrb[0].mxu0
    %v339 = vadd.f32 %v200, %v338
    %v340 = vpop.f32.mrb[0].mxu0
    %v341 = vadd.f32 %v204, %v340
    %v342 = vpop.f32.mrb[0].mxu0
    %v343 = vpop.f32.mrb[0].mxu0
    %344 = vdwg.mxu0
    %v345 = vmax.f32 %v298, 0.0
    %v346 = vmax.f32 %v300, 0.0
    %v347 = vmax.f32 %v339, 0.0
    %v348 = vmax.f32 %v341, 0.0
    %v349 = vpack.c.bf16 %v345, %v345
    %v350 = vpack.c.bf16 %v346, %v346
    %v351 = vpack.c.bf16 %v347, %v347
    %v352 = vpack.c.bf16 %v348, %v348
    %v353 = vld [vmem:[#allocation8] sm:$0xff]
    %v354 = vld [vmem:[#allocation8 + $0x8] sm:$0xff]
    %v355 = vld [vmem:[#allocation8 + $0x10] sm:$0xff]
    %v356 = vld [vmem:[#allocation8 + $0x18] sm:$0xff]
    %v357 = vld [vmem:[#allocation8 + $0x20] sm:$0xff]
    %v358 = vld [vmem:[#allocation8 + $0x28] sm:$0xff]
    %v359 = vld [vmem:[#allocation8 + $0x30] sm:$0xff]
    %v360 = vld [vmem:[#allocation8 + $0x38] sm:$0xff]
    %v361 = vld [vmem:[#allocation8 + $0x40] sm:$0xff]
    %v362 = vld [vmem:[#allocation8 + $0x48] sm:$0xff]
    %v363 = vld [vmem:[#allocation8 + $0x50] sm:$0xff]
    %v364 = vld [vmem:[#allocation8 + $0x58] sm:$0xff]
    %v365 = vld [vmem:[#allocation8 + $0x60] sm:$0xff]
    %v366 = vld [vmem:[#allocation8 + $0x68] sm:$0xff]
    %v367 = vld [vmem:[#allocation8 + $0x70] sm:$0xff]
    %v368 = vld [vmem:[#allocation8 + $0x78] sm:$0xff]
    %v369 = vld [vmem:[#allocation8 + $0x80] sm:$0xff]
    %v370 = vld [vmem:[#allocation8 + $0x88] sm:$0xff]
    %v371 = vld [vmem:[#allocation8 + $0x90] sm:$0xff]
    %v372 = vld [vmem:[#allocation8 + $0x98] sm:$0xff]
    %v373 = vld [vmem:[#allocation8 + $0xa0] sm:$0xff]
    %v374 = vld [vmem:[#allocation8 + $0xa8] sm:$0xff]
    %v375 = vld [vmem:[#allocation8 + $0xb0] sm:$0xff]
    %v376 = vld [vmem:[#allocation8 + $0xb8] sm:$0xff]
    %v377 = vld [vmem:[#allocation8 + $0xc0] sm:$0xff]
    %v378 = vld [vmem:[#allocation8 + $0xc8] sm:$0xff]
    %v379 = vld [vmem:[#allocation8 + $0xd0] sm:$0xff]
    %v380 = vld [vmem:[#allocation8 + $0xd8] sm:$0xff]
    %v381 = vld [vmem:[#allocation8 + $0xe0] sm:$0xff]
    %v382 = vld [vmem:[#allocation8 + $0xe8] sm:$0xff]
    %v383 = vld [vmem:[#allocation8 + $0xf0] sm:$0xff]
    %v384 = vld [vmem:[#allocation8 + $0xf8] sm:$0xff]
    %v385 = vld [vmem:[#allocation8 + $0x100] sm:$0xff]
    %v386 = vld [vmem:[#allocation8 + $0x108] sm:$0xff]
    %v387 = vld [vmem:[#allocation8 + $0x110] sm:$0xff]
    %v388 = vld [vmem:[#allocation8 + $0x118] sm:$0xff]
    %v389 = vld [vmem:[#allocation8 + $0x120] sm:$0xff]
    %v390 = vld [vmem:[#allocation8 + $0x128] sm:$0xff]
    %v391 = vld [vmem:[#allocation8 + $0x130] sm:$0xff]
    %v392 = vld [vmem:[#allocation8 + $0x138] sm:$0xff]
    %v393 = vld [vmem:[#allocation8 + $0x140] sm:$0xff]
    %v394 = vld [vmem:[#allocation8 + $0x148] sm:$0xff]
    %v395 = vld [vmem:[#allocation8 + $0x150] sm:$0xff]
    %v396 = vld [vmem:[#allocation8 + $0x158] sm:$0xff]
    %v397 = vld [vmem:[#allocation8 + $0x160] sm:$0xff]
    %v398 = vld [vmem:[#allocation8 + $0x168] sm:$0xff]
    %v399 = vld [vmem:[#allocation8 + $0x170] sm:$0xff]
    %v400 = vld [vmem:[#allocation8 + $0x178] sm:$0xff]
    %v401 = vld [vmem:[#allocation8 + $0x180] sm:$0xff]
    %v402 = vld [vmem:[#allocation8 + $0x188] sm:$0xff]
    %v403 = vld [vmem:[#allocation8 + $0x190] sm:$0xff]
    %v404 = vld [vmem:[#allocation8 + $0x198] sm:$0xff]
    %v405 = vld [vmem:[#allocation8 + $0x1a0] sm:$0xff]
    %v406 = vld [vmem:[#allocation8 + $0x1a8] sm:$0xff]
    %v407 = vld [vmem:[#allocation8 + $0x1b0] sm:$0xff]
    %v408 = vld [vmem:[#allocation8 + $0x1b8] sm:$0xff]
    %v409 = vld [vmem:[#allocation8 + $0x1c0] sm:$0xff]
    %v410 = vld [vmem:[#allocation8 + $0x1c8] sm:$0xff]
    %v411 = vld [vmem:[#allocation8 + $0x1d0] sm:$0xff]
    %v412 = vld [vmem:[#allocation8 + $0x1d8] sm:$0xff]
    %v413 = vld [vmem:[#allocation8 + $0x1e0] sm:$0xff]
    %v414 = vld [vmem:[#allocation8 + $0x1e8] sm:$0xff]
    %v415 = vld [vmem:[#allocation8 + $0x1f0] sm:$0xff]
    %v416 = vld [vmem:[#allocation8 + $0x1f8] sm:$0xff]
    %v417 = vld [vmem:[#allocation8 + $0x200] sm:$0xff]
    %v418 = vld [vmem:[#allocation8 + $0x208] sm:$0xff]
    %v419 = vld [vmem:[#allocation8 + $0x210] sm:$0xff]
    %v420 = vld [vmem:[#allocation8 + $0x218] sm:$0xff]
    %v421 = vld [vmem:[#allocation8 + $0x220] sm:$0xff]
    %v422 = vld [vmem:[#allocation8 + $0x228] sm:$0xff]
    %v423 = vld [vmem:[#allocation8 + $0x230] sm:$0xff]
    %v424 = vld [vmem:[#allocation8 + $0x238] sm:$0xff]
    %v425 = vld [vmem:[#allocation8 + $0x240] sm:$0xff]
    %v426 = vld [vmem:[#allocation8 + $0x248] sm:$0xff]
    %v427 = vld [vmem:[#allocation8 + $0x250] sm:$0xff]
    %v428 = vld [vmem:[#allocation8 + $0x258] sm:$0xff]
    %v429 = vld [vmem:[#allocation8 + $0x260] sm:$0xff]
    %v430 = vld [vmem:[#allocation8 + $0x268] sm:$0xff]
    %v431 = vld [vmem:[#allocation8 + $0x270] sm:$0xff]
    %v432 = vld [vmem:[#allocation8 + $0x278] sm:$0xff]
    %v433 = vld [vmem:[#allocation8 + $0x280] sm:$0xff]
    %v434 = vld [vmem:[#allocation8 + $0x288] sm:$0xff]
    %v435 = vld [vmem:[#allocation8 + $0x290] sm:$0xff]
    %v436 = vld [vmem:[#allocation8 + $0x298] sm:$0xff]
    %v437 = vld [vmem:[#allocation8 + $0x2a0] sm:$0xff]
    %v438 = vld [vmem:[#allocation8 + $0x2a8] sm:$0xff]
    %v439 = vld [vmem:[#allocation8 + $0x2b0] sm:$0xff]
    %v440 = vld [vmem:[#allocation8 + $0x2b8] sm:$0xff]
    %v441 = vld [vmem:[#allocation8 + $0x2c0] sm:$0xff]
    %v442 = vld [vmem:[#allocation8 + $0x2c8] sm:$0xff]
    %v443 = vld [vmem:[#allocation8 + $0x2d0] sm:$0xff]
    %v444 = vld [vmem:[#allocation8 + $0x2d8] sm:$0xff]
    %v445 = vld [vmem:[#allocation8 + $0x2e0] sm:$0xff]
    %v446 = vld [vmem:[#allocation8 + $0x2e8] sm:$0xff]
    %v447 = vld [vmem:[#allocation8 + $0x2f0] sm:$0xff]
    %v448 = vld [vmem:[#allocation8 + $0x2f8] sm:$0xff]
    %v449 = vld [vmem:[#allocation8 + $0x300] sm:$0xff]
    %v450 = vld [vmem:[#allocation8 + $0x308] sm:$0xff]
    %v451 = vld [vmem:[#allocation8 + $0x310] sm:$0xff]
    %v452 = vld [vmem:[#allocation8 + $0x318] sm:$0xff]
    %v453 = vld [vmem:[#allocation8 + $0x320] sm:$0xff]
    %v454 = vld [vmem:[#allocation8 + $0x328] sm:$0xff]
    %v455 = vld [vmem:[#allocation8 + $0x330] sm:$0xff]
    %v456 = vld [vmem:[#allocation8 + $0x338] sm:$0xff]
    %v457 = vld [vmem:[#allocation8 + $0x340] sm:$0xff]
    %v458 = vld [vmem:[#allocation8 + $0x348] sm:$0xff]
    %v459 = vld [vmem:[#allocation8 + $0x350] sm:$0xff]
    %v460 = vld [vmem:[#allocation8 + $0x358] sm:$0xff]
    %v461 = vld [vmem:[#allocation8 + $0x360] sm:$0xff]
    %v462 = vld [vmem:[#allocation8 + $0x368] sm:$0xff]
    %v463 = vld [vmem:[#allocation8 + $0x370] sm:$0xff]
    %v464 = vld [vmem:[#allocation8 + $0x378] sm:$0xff]
    %v465 = vld [vmem:[#allocation8 + $0x380] sm:$0xff]
    %v466 = vld [vmem:[#allocation8 + $0x388] sm:$0xff]
    %v467 = vld [vmem:[#allocation8 + $0x390] sm:$0xff]
    %v468 = vld [vmem:[#allocation8 + $0x398] sm:$0xff]
    %v469 = vld [vmem:[#allocation8 + $0x3a0] sm:$0xff]
    %v470 = vld [vmem:[#allocation8 + $0x3a8] sm:$0xff]
    %v471 = vld [vmem:[#allocation8 + $0x3b0] sm:$0xff]
    %v472 = vld [vmem:[#allocation8 + $0x3b8] sm:$0xff]
    %v473 = vld [vmem:[#allocation8 + $0x3c0] sm:$0xff]
    %v474 = vld [vmem:[#allocation8 + $0x3c8] sm:$0xff]
    %v475 = vld [vmem:[#allocation8 + $0x3d0] sm:$0xff]
    %v476 = vld [vmem:[#allocation8 + $0x3d8] sm:$0xff]
    %v477 = vld [vmem:[#allocation8 + $0x3e0] sm:$0xff]
    %v478 = vld [vmem:[#allocation8 + $0x3e8] sm:$0xff]
    %v479 = vld [vmem:[#allocation8 + $0x3f0] sm:$0xff]
    %v480 = vld [vmem:[#allocation8 + $0x3f8] sm:$0xff]
    %v481 = vld [vmem:[#allocation8 + $0x400] sm:$0xff]
    %v482 = vld [vmem:[#allocation8 + $0x408] sm:$0xff]
    %v483 = vld [vmem:[#allocation8 + $0x410] sm:$0xff]
    %v484 = vld [vmem:[#allocation8 + $0x418] sm:$0xff]
    %v485 = vld [vmem:[#allocation8 + $0x420] sm:$0xff]
    %v486 = vld [vmem:[#allocation8 + $0x428] sm:$0xff]
    %v487 = vld [vmem:[#allocation8 + $0x430] sm:$0xff]
    %v488 = vld [vmem:[#allocation8 + $0x438] sm:$0xff]
    %v489 = vld [vmem:[#allocation8 + $0x440] sm:$0xff]
    %v490 = vld [vmem:[#allocation8 + $0x448] sm:$0xff]
    %v491 = vld [vmem:[#allocation8 + $0x450] sm:$0xff]
    %v492 = vld [vmem:[#allocation8 + $0x458] sm:$0xff]
    %v493 = vld [vmem:[#allocation8 + $0x460] sm:$0xff]
    %v494 = vld [vmem:[#allocation8 + $0x468] sm:$0xff]
    %v495 = vld [vmem:[#allocation8 + $0x470] sm:$0xff]
    %v496 = vld [vmem:[#allocation8 + $0x478] sm:$0xff]
    %v497 = vld [vmem:[#allocation8 + $0x480] sm:$0xff]
    %v498 = vld [vmem:[#allocation8 + $0x488] sm:$0xff]
    %v499 = vld [vmem:[#allocation8 + $0x490] sm:$0xff]
    %v500 = vld [vmem:[#allocation8 + $0x498] sm:$0xff]
    %v501 = vld [vmem:[#allocation8 + $0x4a0] sm:$0xff]
    %v502 = vld [vmem:[#allocation8 + $0x4a8] sm:$0xff]
    %v503 = vld [vmem:[#allocation8 + $0x4b0] sm:$0xff]
    %v504 = vld [vmem:[#allocation8 + $0x4b8] sm:$0xff]
    %v505 = vld [vmem:[#allocation8 + $0x4c0] sm:$0xff]
    %v506 = vld [vmem:[#allocation8 + $0x4c8] sm:$0xff]
    %v507 = vld [vmem:[#allocation8 + $0x4d0] sm:$0xff]
    %v508 = vld [vmem:[#allocation8 + $0x4d8] sm:$0xff]
    %v509 = vld [vmem:[#allocation8 + $0x4e0] sm:$0xff]
    %v510 = vld [vmem:[#allocation8 + $0x4e8] sm:$0xff]
    %v511 = vld [vmem:[#allocation8 + $0x4f0] sm:$0xff]
    %v512 = vld [vmem:[#allocation8 + $0x4f8] sm:$0xff]
    %v513 = vld [vmem:[#allocation8 + $0x500] sm:$0xff]
    %v514 = vld [vmem:[#allocation8 + $0x508] sm:$0xff]
    %v515 = vld [vmem:[#allocation8 + $0x510] sm:$0xff]
    %v516 = vld [vmem:[#allocation8 + $0x518] sm:$0xff]
    %v517 = vld [vmem:[#allocation8 + $0x520] sm:$0xff]
    %v518 = vld [vmem:[#allocation8 + $0x528] sm:$0xff]
    %v519 = vld [vmem:[#allocation8 + $0x530] sm:$0xff]
    %v520 = vld [vmem:[#allocation8 + $0x538] sm:$0xff]
    %v521 = vld [vmem:[#allocation8 + $0x540] sm:$0xff]
    %v522 = vld [vmem:[#allocation8 + $0x548] sm:$0xff]
    %v523 = vld [vmem:[#allocation8 + $0x550] sm:$0xff]
    %v524 = vld [vmem:[#allocation8 + $0x558] sm:$0xff]
    %v525 = vld [vmem:[#allocation8 + $0x560] sm:$0xff]
    %v526 = vld [vmem:[#allocation8 + $0x568] sm:$0xff]
    %v527 = vld [vmem:[#allocation8 + $0x570] sm:$0xff]
    %v528 = vld [vmem:[#allocation8 + $0x578] sm:$0xff]
    %v529 = vld [vmem:[#allocation8 + $0x580] sm:$0xff]
    %v530 = vld [vmem:[#allocation8 + $0x588] sm:$0xff]
    %v531 = vld [vmem:[#allocation8 + $0x590] sm:$0xff]
    %v532 = vld [vmem:[#allocation8 + $0x598] sm:$0xff]
    %v533 = vld [vmem:[#allocation8 + $0x5a0] sm:$0xff]
    %v534 = vld [vmem:[#allocation8 + $0x5a8] sm:$0xff]
    %v535 = vld [vmem:[#allocation8 + $0x5b0] sm:$0xff]
    %v536 = vld [vmem:[#allocation8 + $0x5b8] sm:$0xff]
    %v537 = vld [vmem:[#allocation8 + $0x5c0] sm:$0xff]
    %v538 = vld [vmem:[#allocation8 + $0x5c8] sm:$0xff]
    %v539 = vld [vmem:[#allocation8 + $0x5d0] sm:$0xff]
    %v540 = vld [vmem:[#allocation8 + $0x5d8] sm:$0xff]
    %v541 = vld [vmem:[#allocation8 + $0x5e0] sm:$0xff]
    %v542 = vld [vmem:[#allocation8 + $0x5e8] sm:$0xff]
    %v543 = vld [vmem:[#allocation8 + $0x5f0] sm:$0xff]
    %v544 = vld [vmem:[#allocation8 + $0x5f8] sm:$0xff]
    %v545 = vld [vmem:[#allocation8 + $0x600] sm:$0xff]
    %v546 = vld [vmem:[#allocation8 + $0x608] sm:$0xff]
    %v547 = vld [vmem:[#allocation8 + $0x610] sm:$0xff]
    %v548 = vld [vmem:[#allocation8 + $0x618] sm:$0xff]
    %v549 = vld [vmem:[#allocation8 + $0x620] sm:$0xff]
    %v550 = vld [vmem:[#allocation8 + $0x628] sm:$0xff]
    %v551 = vld [vmem:[#allocation8 + $0x630] sm:$0xff]
    %v552 = vld [vmem:[#allocation8 + $0x638] sm:$0xff]
    %v553 = vld [vmem:[#allocation8 + $0x640] sm:$0xff]
    %v554 = vld [vmem:[#allocation8 + $0x648] sm:$0xff]
    %v555 = vld [vmem:[#allocation8 + $0x650] sm:$0xff]
    %v556 = vld [vmem:[#allocation8 + $0x658] sm:$0xff]
    %v557 = vld [vmem:[#allocation8 + $0x660] sm:$0xff]
    %v558 = vld [vmem:[#allocation8 + $0x668] sm:$0xff]
    %v559 = vld [vmem:[#allocation8 + $0x670] sm:$0xff]
    %v560 = vld [vmem:[#allocation8 + $0x678] sm:$0xff]
    %v561 = vld [vmem:[#allocation8 + $0x680] sm:$0xff]
    %v562 = vld [vmem:[#allocation8 + $0x688] sm:$0xff]
    %v563 = vld [vmem:[#allocation8 + $0x690] sm:$0xff]
    %v564 = vld [vmem:[#allocation8 + $0x698] sm:$0xff]
    %v565 = vld [vmem:[#allocation8 + $0x6a0] sm:$0xff]
    %v566 = vld [vmem:[#allocation8 + $0x6a8] sm:$0xff]
    %v567 = vld [vmem:[#allocation8 + $0x6b0] sm:$0xff]
    %v568 = vld [vmem:[#allocation8 + $0x6b8] sm:$0xff]
    %v569 = vld [vmem:[#allocation8 + $0x6c0] sm:$0xff]
    %v570 = vld [vmem:[#allocation8 + $0x6c8] sm:$0xff]
    %v571 = vld [vmem:[#allocation8 + $0x6d0] sm:$0xff]
    %v572 = vld [vmem:[#allocation8 + $0x6d8] sm:$0xff]
    %v573 = vld [vmem:[#allocation8 + $0x6e0] sm:$0xff]
    %v574 = vld [vmem:[#allocation8 + $0x6e8] sm:$0xff]
    %v575 = vld [vmem:[#allocation8 + $0x6f0] sm:$0xff]
    %v576 = vld [vmem:[#allocation8 + $0x6f8] sm:$0xff]
    %v577 = vld [vmem:[#allocation8 + $0x700] sm:$0xff]
    %v578 = vld [vmem:[#allocation8 + $0x708] sm:$0xff]
    %v579 = vld [vmem:[#allocation8 + $0x710] sm:$0xff]
    %v580 = vld [vmem:[#allocation8 + $0x718] sm:$0xff]
    %v581 = vld [vmem:[#allocation8 + $0x720] sm:$0xff]
    %v582 = vld [vmem:[#allocation8 + $0x728] sm:$0xff]
    %v583 = vld [vmem:[#allocation8 + $0x730] sm:$0xff]
    %v584 = vld [vmem:[#allocation8 + $0x738] sm:$0xff]
    %v585 = vld [vmem:[#allocation8 + $0x740] sm:$0xff]
    %v586 = vld [vmem:[#allocation8 + $0x748] sm:$0xff]
    %v587 = vld [vmem:[#allocation8 + $0x750] sm:$0xff]
    %v588 = vld [vmem:[#allocation8 + $0x758] sm:$0xff]
    %v589 = vld [vmem:[#allocation8 + $0x760] sm:$0xff]
    %v590 = vld [vmem:[#allocation8 + $0x768] sm:$0xff]
    %v591 = vld [vmem:[#allocation8 + $0x770] sm:$0xff]
    %v592 = vld [vmem:[#allocation8 + $0x778] sm:$0xff]
    %v593 = vld [vmem:[#allocation8 + $0x780] sm:$0xff]
    %v594 = vld [vmem:[#allocation8 + $0x788] sm:$0xff]
    %v595 = vld [vmem:[#allocation8 + $0x790] sm:$0xff]
    %v596 = vld [vmem:[#allocation8 + $0x798] sm:$0xff]
    %v597 = vld [vmem:[#allocation8 + $0x7a0] sm:$0xff]
    %v598 = vld [vmem:[#allocation8 + $0x7a8] sm:$0xff]
    %v599 = vld [vmem:[#allocation8 + $0x7b0] sm:$0xff]
    %v600 = vld [vmem:[#allocation8 + $0x7b8] sm:$0xff]
    %v601 = vld [vmem:[#allocation8 + $0x7c0] sm:$0xff]
    %v602 = vld [vmem:[#allocation8 + $0x7c8] sm:$0xff]
    %v603 = vld [vmem:[#allocation8 + $0x7d0] sm:$0xff]
    %v604 = vld [vmem:[#allocation8 + $0x7d8] sm:$0xff]
    %v605 = vld [vmem:[#allocation8 + $0x7e0] sm:$0xff]
    %v606 = vld [vmem:[#allocation8 + $0x7e8] sm:$0xff]
    %v607 = vld [vmem:[#allocation8 + $0x7f0] sm:$0xff]
    %v608 = vld [vmem:[#allocation8 + $0x7f8] sm:$0xff]
    %v609 = vld [vmem:[%s5] sm:$0xff]
    %v611 = vlaneseq
    %v612 = vshrl.u32 %v611, 7
    %v613 = vsub.s32 0, %v612
    %v614 = vrot.slane %v609, %v613
    %v615 = vlaneseq
    %v616 = vshrl.u32 %v615, 7
    %v617 = vsub.s32 1, %v616
    %v618 = vrot.slane %v609, %v617
    %v619 = vlaneseq
    %v620 = vshrl.u32 %v619, 7
    %v621 = vsub.s32 2, %v620
    %v622 = vrot.slane %v609, %v621
    %v623 = vlaneseq
    %v624 = vshrl.u32 %v623, 7
    %v625 = vsub.s32 3, %v624
    %v626 = vrot.slane %v609, %v625
    %v627 = vlaneseq
    %v628 = vshrl.u32 %v627, 7
    %v629 = vsub.s32 4, %v628
    %v630 = vrot.slane %v609, %v629
    %v631 = vlaneseq
    %v632 = vshrl.u32 %v631, 7
    %v633 = vsub.s32 5, %v632
    %v634 = vrot.slane %v609, %v633
    %v635 = vlaneseq
    %v636 = vshrl.u32 %v635, 7
    %v637 = vsub.s32 6, %v636
    %v638 = vrot.slane %v609, %v637
    %v639 = vlaneseq
    %v640 = vshrl.u32 %v639, 7
    %v641 = vsub.s32 7, %v640
    %v642 = vrot.slane %v609, %v641
    %v907 = vunpack.c.l.b16 %v353
    %v908 = vunpack.c.h.b16 %v353
    %v909 = vunpack.c.l.b16 %v354
    %v910 = vunpack.c.h.b16 %v354
    %v911 = vunpack.c.l.b16 %v355
    %v912 = vunpack.c.h.b16 %v355
    %v913 = vunpack.c.l.b16 %v356
    %v914 = vunpack.c.h.b16 %v356
    %v915 = vunpack.c.l.b16 %v357
    %v916 = vunpack.c.h.b16 %v357
    %v917 = vunpack.c.l.b16 %v358
    %v918 = vunpack.c.h.b16 %v358
    %v919 = vunpack.c.l.b16 %v359
    %v920 = vunpack.c.h.b16 %v359
    %v921 = vunpack.c.l.b16 %v360
    %v922 = vunpack.c.h.b16 %v360
    %v923 = vunpack.c.l.b16 %v361
    %v924 = vunpack.c.h.b16 %v361
    %v925 = vunpack.c.l.b16 %v362
    %v926 = vunpack.c.h.b16 %v362
    %v927 = vunpack.c.l.b16 %v363
    %v928 = vunpack.c.h.b16 %v363
    %v929 = vunpack.c.l.b16 %v364
    %v930 = vunpack.c.h.b16 %v364
    %v931 = vunpack.c.l.b16 %v365
    %v932 = vunpack.c.h.b16 %v365
    %v933 = vunpack.c.l.b16 %v366
    %v934 = vunpack.c.h.b16 %v366
    %v935 = vunpack.c.l.b16 %v367
    %v936 = vunpack.c.h.b16 %v367
    %v937 = vunpack.c.l.b16 %v368
    %v938 = vunpack.c.h.b16 %v368
    %v939 = vunpack.c.l.b16 %v369
    %v940 = vunpack.c.h.b16 %v369
    %v941 = vunpack.c.l.b16 %v370
    %v942 = vunpack.c.h.b16 %v370
    %v943 = vunpack.c.l.b16 %v371
    %v944 = vunpack.c.h.b16 %v371
    %v945 = vunpack.c.l.b16 %v372
    %v946 = vunpack.c.h.b16 %v372
    %v947 = vunpack.c.l.b16 %v373
    %v948 = vunpack.c.h.b16 %v373
    %v949 = vunpack.c.l.b16 %v374
    %v950 = vunpack.c.h.b16 %v374
    %v951 = vunpack.c.l.b16 %v375
    %v952 = vunpack.c.h.b16 %v375
    %v953 = vunpack.c.l.b16 %v376
    %v954 = vunpack.c.h.b16 %v376
    %v955 = vunpack.c.l.b16 %v377
    %v956 = vunpack.c.h.b16 %v377
    %v957 = vunpack.c.l.b16 %v378
    %v958 = vunpack.c.h.b16 %v378
    %v959 = vunpack.c.l.b16 %v379
    %v960 = vunpack.c.h.b16 %v379
    %v961 = vunpack.c.l.b16 %v380
    %v962 = vunpack.c.h.b16 %v380
    %v963 = vunpack.c.l.b16 %v381
    %v964 = vunpack.c.h.b16 %v381
    %v965 = vunpack.c.l.b16 %v382
    %v966 = vunpack.c.h.b16 %v382
    %v967 = vunpack.c.l.b16 %v383
    %v968 = vunpack.c.h.b16 %v383
    %v969 = vunpack.c.l.b16 %v384
    %v970 = vunpack.c.h.b16 %v384
    %v971 = vunpack.c.l.b16 %v385
    %v972 = vunpack.c.h.b16 %v385
    %v973 = vunpack.c.l.b16 %v386
    %v974 = vunpack.c.h.b16 %v386
    %v975 = vunpack.c.l.b16 %v387
    %v976 = vunpack.c.h.b16 %v387
    %v977 = vunpack.c.l.b16 %v388
    %v978 = vunpack.c.h.b16 %v388
    %v979 = vunpack.c.l.b16 %v389
    %v980 = vunpack.c.h.b16 %v389
    %v981 = vunpack.c.l.b16 %v390
    %v982 = vunpack.c.h.b16 %v390
    %v983 = vunpack.c.l.b16 %v391
    %v984 = vunpack.c.h.b16 %v391
    %v985 = vunpack.c.l.b16 %v392
    %v986 = vunpack.c.h.b16 %v392
    %v987 = vunpack.c.l.b16 %v393
    %v988 = vunpack.c.h.b16 %v393
    %v989 = vunpack.c.l.b16 %v394
    %v990 = vunpack.c.h.b16 %v394
    %v991 = vunpack.c.l.b16 %v395
    %v992 = vunpack.c.h.b16 %v395
    %v993 = vunpack.c.l.b16 %v396
    %v994 = vunpack.c.h.b16 %v396
    %v995 = vunpack.c.l.b16 %v397
    %v996 = vunpack.c.h.b16 %v397
    %v997 = vunpack.c.l.b16 %v398
    %v998 = vunpack.c.h.b16 %v398
    %v999 = vunpack.c.l.b16 %v399
    %v1000 = vunpack.c.h.b16 %v399
    %v1001 = vunpack.c.l.b16 %v400
    %v1002 = vunpack.c.h.b16 %v400
    %v1003 = vunpack.c.l.b16 %v401
    %v1004 = vunpack.c.h.b16 %v401
    %v1005 = vunpack.c.l.b16 %v402
    %v1006 = vunpack.c.h.b16 %v402
    %v1007 = vunpack.c.l.b16 %v403
    %v1008 = vunpack.c.h.b16 %v403
    %v1009 = vunpack.c.l.b16 %v404
    %v1010 = vunpack.c.h.b16 %v404
    %v1011 = vunpack.c.l.b16 %v405
    %v1012 = vunpack.c.h.b16 %v405
    %v1013 = vunpack.c.l.b16 %v406
    %v1014 = vunpack.c.h.b16 %v406
    %v1015 = vunpack.c.l.b16 %v407
    %v1016 = vunpack.c.h.b16 %v407
    %v1017 = vunpack.c.l.b16 %v408
    %v1018 = vunpack.c.h.b16 %v408
    %v1019 = vunpack.c.l.b16 %v409
    %v1020 = vunpack.c.h.b16 %v409
    %v1021 = vunpack.c.l.b16 %v410
    %v1022 = vunpack.c.h.b16 %v410
    %v1023 = vunpack.c.l.b16 %v411
    %v1024 = vunpack.c.h.b16 %v411
    %v1025 = vunpack.c.l.b16 %v412
    %v1026 = vunpack.c.h.b16 %v412
    %v1027 = vunpack.c.l.b16 %v413
    %v1028 = vunpack.c.h.b16 %v413
    %v1029 = vunpack.c.l.b16 %v414
    %v1030 = vunpack.c.h.b16 %v414
    %v1031 = vunpack.c.l.b16 %v415
    %v1032 = vunpack.c.h.b16 %v415
    %v1033 = vunpack.c.l.b16 %v416
    %v1034 = vunpack.c.h.b16 %v416
    %v1035 = vunpack.c.l.b16 %v417
    %v1036 = vunpack.c.h.b16 %v417
    %v1037 = vunpack.c.l.b16 %v418
    %v1038 = vunpack.c.h.b16 %v418
    %v1039 = vunpack.c.l.b16 %v419
    %v1040 = vunpack.c.h.b16 %v419
    %v1041 = vunpack.c.l.b16 %v420
    %v1042 = vunpack.c.h.b16 %v420
    %v1043 = vunpack.c.l.b16 %v421
    %v1044 = vunpack.c.h.b16 %v421
    %v1045 = vunpack.c.l.b16 %v422
    %v1046 = vunpack.c.h.b16 %v422
    %v1047 = vunpack.c.l.b16 %v423
    %v1048 = vunpack.c.h.b16 %v423
    %v1049 = vunpack.c.l.b16 %v424
    %v1050 = vunpack.c.h.b16 %v424
    %v1051 = vunpack.c.l.b16 %v425
    %v1052 = vunpack.c.h.b16 %v425
    %v1053 = vunpack.c.l.b16 %v426
    %v1054 = vunpack.c.h.b16 %v426
    %v1055 = vunpack.c.l.b16 %v427
    %v1056 = vunpack.c.h.b16 %v427
    %v1057 = vunpack.c.l.b16 %v428
    %v1058 = vunpack.c.h.b16 %v428
    %v1059 = vunpack.c.l.b16 %v429
    %v1060 = vunpack.c.h.b16 %v429
    %v1061 = vunpack.c.l.b16 %v430
    %v1062 = vunpack.c.h.b16 %v430
    %v1063 = vunpack.c.l.b16 %v431
    %v1064 = vunpack.c.h.b16 %v431
    %v1065 = vunpack.c.l.b16 %v432
    %v1066 = vunpack.c.h.b16 %v432
    %v1067 = vunpack.c.l.b16 %v433
    %v1068 = vunpack.c.h.b16 %v433
    %v1069 = vunpack.c.l.b16 %v434
    %v1070 = vunpack.c.h.b16 %v434
    %v1071 = vunpack.c.l.b16 %v435
    %v1072 = vunpack.c.h.b16 %v435
    %v1073 = vunpack.c.l.b16 %v436
    %v1074 = vunpack.c.h.b16 %v436
    %v1075 = vunpack.c.l.b16 %v437
    %v1076 = vunpack.c.h.b16 %v437
    %v1077 = vunpack.c.l.b16 %v438
    %v1078 = vunpack.c.h.b16 %v438
    %v1079 = vunpack.c.l.b16 %v439
    %v1080 = vunpack.c.h.b16 %v439
    %v1081 = vunpack.c.l.b16 %v440
    %v1082 = vunpack.c.h.b16 %v440
    %v1083 = vunpack.c.l.b16 %v441
    %v1084 = vunpack.c.h.b16 %v441
    %v1085 = vunpack.c.l.b16 %v442
    %v1086 = vunpack.c.h.b16 %v442
    %v1087 = vunpack.c.l.b16 %v443
    %v1088 = vunpack.c.h.b16 %v443
    %v1089 = vunpack.c.l.b16 %v444
    %v1090 = vunpack.c.h.b16 %v444
    %v1091 = vunpack.c.l.b16 %v445
    %v1092 = vunpack.c.h.b16 %v445
    %v1093 = vunpack.c.l.b16 %v446
    %v1094 = vunpack.c.h.b16 %v446
    %v1095 = vunpack.c.l.b16 %v447
    %v1096 = vunpack.c.h.b16 %v447
    %v1097 = vunpack.c.l.b16 %v448
    %v1098 = vunpack.c.h.b16 %v448
    %v1099 = vunpack.c.l.b16 %v449
    %v1100 = vunpack.c.h.b16 %v449
    %v1101 = vunpack.c.l.b16 %v450
    %v1102 = vunpack.c.h.b16 %v450
    %v1103 = vunpack.c.l.b16 %v451
    %v1104 = vunpack.c.h.b16 %v451
    %v1105 = vunpack.c.l.b16 %v452
    %v1106 = vunpack.c.h.b16 %v452
    %v1107 = vunpack.c.l.b16 %v453
    %v1108 = vunpack.c.h.b16 %v453
    %v1109 = vunpack.c.l.b16 %v454
    %v1110 = vunpack.c.h.b16 %v454
    %v1111 = vunpack.c.l.b16 %v455
    %v1112 = vunpack.c.h.b16 %v455
    %v1113 = vunpack.c.l.b16 %v456
    %v1114 = vunpack.c.h.b16 %v456
    %v1115 = vunpack.c.l.b16 %v457
    %v1116 = vunpack.c.h.b16 %v457
    %v1117 = vunpack.c.l.b16 %v458
    %v1118 = vunpack.c.h.b16 %v458
    %v1119 = vunpack.c.l.b16 %v459
    %v1120 = vunpack.c.h.b16 %v459
    %v1121 = vunpack.c.l.b16 %v460
    %v1122 = vunpack.c.h.b16 %v460
    %v1123 = vunpack.c.l.b16 %v461
    %v1124 = vunpack.c.h.b16 %v461
    %v1125 = vunpack.c.l.b16 %v462
    %v1126 = vunpack.c.h.b16 %v462
    %v1127 = vunpack.c.l.b16 %v463
    %v1128 = vunpack.c.h.b16 %v463
    %v1129 = vunpack.c.l.b16 %v464
    %v1130 = vunpack.c.h.b16 %v464
    %v1131 = vunpack.c.l.b16 %v465
    %v1132 = vunpack.c.h.b16 %v465
    %v1133 = vunpack.c.l.b16 %v466
    %v1134 = vunpack.c.h.b16 %v466
    %v1135 = vunpack.c.l.b16 %v467
    %v1136 = vunpack.c.h.b16 %v467
    %v1137 = vunpack.c.l.b16 %v468
    %v1138 = vunpack.c.h.b16 %v468
    %v1139 = vunpack.c.l.b16 %v469
    %v1140 = vunpack.c.h.b16 %v469
    %v1141 = vunpack.c.l.b16 %v470
    %v1142 = vunpack.c.h.b16 %v470
    %v1143 = vunpack.c.l.b16 %v471
    %v1144 = vunpack.c.h.b16 %v471
    %v1145 = vunpack.c.l.b16 %v472
    %v1146 = vunpack.c.h.b16 %v472
    %v1147 = vunpack.c.l.b16 %v473
    %v1148 = vunpack.c.h.b16 %v473
    %v1149 = vunpack.c.l.b16 %v474
    %v1150 = vunpack.c.h.b16 %v474
    %v1151 = vunpack.c.l.b16 %v475
    %v1152 = vunpack.c.h.b16 %v475
    %v1153 = vunpack.c.l.b16 %v476
    %v1154 = vunpack.c.h.b16 %v476
    %v1155 = vunpack.c.l.b16 %v477
    %v1156 = vunpack.c.h.b16 %v477
    %v1157 = vunpack.c.l.b16 %v478
    %v1158 = vunpack.c.h.b16 %v478
    %v1159 = vunpack.c.l.b16 %v479
    %v1160 = vunpack.c.h.b16 %v479
    %v1161 = vunpack.c.l.b16 %v480
    %v1162 = vunpack.c.h.b16 %v480
    %v1163 = vunpack.c.l.b16 %v481
    %v1164 = vunpack.c.h.b16 %v481
    %v1165 = vunpack.c.l.b16 %v482
    %v1166 = vunpack.c.h.b16 %v482
    %v1167 = vunpack.c.l.b16 %v483
    %v1168 = vunpack.c.h.b16 %v483
    %v1169 = vunpack.c.l.b16 %v484
    %v1170 = vunpack.c.h.b16 %v484
    %v1171 = vunpack.c.l.b16 %v485
    %v1172 = vunpack.c.h.b16 %v485
    %v1173 = vunpack.c.l.b16 %v486
    %v1174 = vunpack.c.h.b16 %v486
    %v1175 = vunpack.c.l.b16 %v487
    %v1176 = vunpack.c.h.b16 %v487
    %v1177 = vunpack.c.l.b16 %v488
    %v1178 = vunpack.c.h.b16 %v488
    %v1179 = vunpack.c.l.b16 %v489
    %v1180 = vunpack.c.h.b16 %v489
    %v1181 = vunpack.c.l.b16 %v490
    %v1182 = vunpack.c.h.b16 %v490
    %v1183 = vunpack.c.l.b16 %v491
    %v1184 = vunpack.c.h.b16 %v491
    %v1185 = vunpack.c.l.b16 %v492
    %v1186 = vunpack.c.h.b16 %v492
    %v1187 = vunpack.c.l.b16 %v493
    %v1188 = vunpack.c.h.b16 %v493
    %v1189 = vunpack.c.l.b16 %v494
    %v1190 = vunpack.c.h.b16 %v494
    %v1191 = vunpack.c.l.b16 %v495
    %v1192 = vunpack.c.h.b16 %v495
    %v1193 = vunpack.c.l.b16 %v496
    %v1194 = vunpack.c.h.b16 %v496
    %v1195 = vunpack.c.l.b16 %v497
    %v1196 = vunpack.c.h.b16 %v497
    %v1197 = vunpack.c.l.b16 %v498
    %v1198 = vunpack.c.h.b16 %v498
    %v1199 = vunpack.c.l.b16 %v499
    %v1200 = vunpack.c.h.b16 %v499
    %v1201 = vunpack.c.l.b16 %v500
    %v1202 = vunpack.c.h.b16 %v500
    %v1203 = vunpack.c.l.b16 %v501
    %v1204 = vunpack.c.h.b16 %v501
    %v1205 = vunpack.c.l.b16 %v502
    %v1206 = vunpack.c.h.b16 %v502
    %v1207 = vunpack.c.l.b16 %v503
    %v1208 = vunpack.c.h.b16 %v503
    %v1209 = vunpack.c.l.b16 %v504
    %v1210 = vunpack.c.h.b16 %v504
    %v1211 = vunpack.c.l.b16 %v505
    %v1212 = vunpack.c.h.b16 %v505
    %v1213 = vunpack.c.l.b16 %v506
    %v1214 = vunpack.c.h.b16 %v506
    %v1215 = vunpack.c.l.b16 %v507
    %v1216 = vunpack.c.h.b16 %v507
    %v1217 = vunpack.c.l.b16 %v508
    %v1218 = vunpack.c.h.b16 %v508
    %v1219 = vunpack.c.l.b16 %v509
    %v1220 = vunpack.c.h.b16 %v509
    %v1221 = vunpack.c.l.b16 %v510
    %v1222 = vunpack.c.h.b16 %v510
    %v1223 = vunpack.c.l.b16 %v511
    %v1224 = vunpack.c.h.b16 %v511
    %v1225 = vunpack.c.l.b16 %v512
    %v1226 = vunpack.c.h.b16 %v512
    %v1227 = vunpack.c.l.b16 %v513
    %v1228 = vunpack.c.h.b16 %v513
    %v1229 = vunpack.c.l.b16 %v514
    %v1230 = vunpack.c.h.b16 %v514
    %v1231 = vunpack.c.l.b16 %v515
    %v1232 = vunpack.c.h.b16 %v515
    %v1233 = vunpack.c.l.b16 %v516
    %v1234 = vunpack.c.h.b16 %v516
    %v1235 = vunpack.c.l.b16 %v517
    %v1236 = vunpack.c.h.b16 %v517
    %v1237 = vunpack.c.l.b16 %v518
    %v1238 = vunpack.c.h.b16 %v518
    %v1239 = vunpack.c.l.b16 %v519
    %v1240 = vunpack.c.h.b16 %v519
    %v1241 = vunpack.c.l.b16 %v520
    %v1242 = vunpack.c.h.b16 %v520
    %v1243 = vunpack.c.l.b16 %v521
    %v1244 = vunpack.c.h.b16 %v521
    %v1245 = vunpack.c.l.b16 %v522
    %v1246 = vunpack.c.h.b16 %v522
    %v1247 = vunpack.c.l.b16 %v523
    %v1248 = vunpack.c.h.b16 %v523
    %v1249 = vunpack.c.l.b16 %v524
    %v1250 = vunpack.c.h.b16 %v524
    %v1251 = vunpack.c.l.b16 %v525
    %v1252 = vunpack.c.h.b16 %v525
    %v1253 = vunpack.c.l.b16 %v526
    %v1254 = vunpack.c.h.b16 %v526
    %v1255 = vunpack.c.l.b16 %v527
    %v1256 = vunpack.c.h.b16 %v527
    %v1257 = vunpack.c.l.b16 %v528
    %v1258 = vunpack.c.h.b16 %v528
    %v1259 = vunpack.c.l.b16 %v529
    %v1260 = vunpack.c.h.b16 %v529
    %v1261 = vunpack.c.l.b16 %v530
    %v1262 = vunpack.c.h.b16 %v530
    %v1263 = vunpack.c.l.b16 %v531
    %v1264 = vunpack.c.h.b16 %v531
    %v1265 = vunpack.c.l.b16 %v532
    %v1266 = vunpack.c.h.b16 %v532
    %v1267 = vunpack.c.l.b16 %v533
    %v1268 = vunpack.c.h.b16 %v533
    %v1269 = vunpack.c.l.b16 %v534
    %v1270 = vunpack.c.h.b16 %v534
    %v1271 = vunpack.c.l.b16 %v535
    %v1272 = vunpack.c.h.b16 %v535
    %v1273 = vunpack.c.l.b16 %v536
    %v1274 = vunpack.c.h.b16 %v536
    %v1275 = vunpack.c.l.b16 %v537
    %v1276 = vunpack.c.h.b16 %v537
    %v1277 = vunpack.c.l.b16 %v538
    %v1278 = vunpack.c.h.b16 %v538
    %v1279 = vunpack.c.l.b16 %v539
    %v1280 = vunpack.c.h.b16 %v539
    %v1281 = vunpack.c.l.b16 %v540
    %v1282 = vunpack.c.h.b16 %v540
    %v1283 = vunpack.c.l.b16 %v541
    %v1284 = vunpack.c.h.b16 %v541
    %v1285 = vunpack.c.l.b16 %v542
    %v1286 = vunpack.c.h.b16 %v542
    %v1287 = vunpack.c.l.b16 %v543
    %v1288 = vunpack.c.h.b16 %v543
    %v1289 = vunpack.c.l.b16 %v544
    %v1290 = vunpack.c.h.b16 %v544
    %v1291 = vunpack.c.l.b16 %v545
    %v1292 = vunpack.c.h.b16 %v545
    %v1293 = vunpack.c.l.b16 %v546
    %v1294 = vunpack.c.h.b16 %v546
    %v1295 = vunpack.c.l.b16 %v547
    %v1296 = vunpack.c.h.b16 %v547
    %v1297 = vunpack.c.l.b16 %v548
    %v1298 = vunpack.c.h.b16 %v548
    %v1299 = vunpack.c.l.b16 %v549
    %v1300 = vunpack.c.h.b16 %v549
    %v1301 = vunpack.c.l.b16 %v550
    %v1302 = vunpack.c.h.b16 %v550
    %v1303 = vunpack.c.l.b16 %v551
    %v1304 = vunpack.c.h.b16 %v551
    %v1305 = vunpack.c.l.b16 %v552
    %v1306 = vunpack.c.h.b16 %v552
    %v1307 = vunpack.c.l.b16 %v553
    %v1308 = vunpack.c.h.b16 %v553
    %v1309 = vunpack.c.l.b16 %v554
    %v1310 = vunpack.c.h.b16 %v554
    %v1311 = vunpack.c.l.b16 %v555
    %v1312 = vunpack.c.h.b16 %v555
    %v1313 = vunpack.c.l.b16 %v556
    %v1314 = vunpack.c.h.b16 %v556
    %v1315 = vunpack.c.l.b16 %v557
    %v1316 = vunpack.c.h.b16 %v557
    %v1317 = vunpack.c.l.b16 %v558
    %v1318 = vunpack.c.h.b16 %v558
    %v1319 = vunpack.c.l.b16 %v559
    %v1320 = vunpack.c.h.b16 %v559
    %v1321 = vunpack.c.l.b16 %v560
    %v1322 = vunpack.c.h.b16 %v560
    %v1323 = vunpack.c.l.b16 %v561
    %v1324 = vunpack.c.h.b16 %v561
    %v1325 = vunpack.c.l.b16 %v562
    %v1326 = vunpack.c.h.b16 %v562
    %v1327 = vunpack.c.l.b16 %v563
    %v1328 = vunpack.c.h.b16 %v563
    %v1329 = vunpack.c.l.b16 %v564
    %v1330 = vunpack.c.h.b16 %v564
    %v1331 = vunpack.c.l.b16 %v565
    %v1332 = vunpack.c.h.b16 %v565
    %v1333 = vunpack.c.l.b16 %v566
    %v1334 = vunpack.c.h.b16 %v566
    %v1335 = vunpack.c.l.b16 %v567
    %v1336 = vunpack.c.h.b16 %v567
    %v1337 = vunpack.c.l.b16 %v568
    %v1338 = vunpack.c.h.b16 %v568
    %v1339 = vunpack.c.l.b16 %v569
    %v1340 = vunpack.c.h.b16 %v569
    %v1341 = vunpack.c.l.b16 %v570
    %v1342 = vunpack.c.h.b16 %v570
    %v1343 = vunpack.c.l.b16 %v571
    %v1344 = vunpack.c.h.b16 %v571
    %v1345 = vunpack.c.l.b16 %v572
    %v1346 = vunpack.c.h.b16 %v572
    %v1347 = vunpack.c.l.b16 %v573
    %v1348 = vunpack.c.h.b16 %v573
    %v1349 = vunpack.c.l.b16 %v574
    %v1350 = vunpack.c.h.b16 %v574
    %v1351 = vunpack.c.l.b16 %v575
    %v1352 = vunpack.c.h.b16 %v575
    %v1353 = vunpack.c.l.b16 %v576
    %v1354 = vunpack.c.h.b16 %v576
    %v1355 = vunpack.c.l.b16 %v577
    %v1356 = vunpack.c.h.b16 %v577
    %v1357 = vunpack.c.l.b16 %v578
    %v1358 = vunpack.c.h.b16 %v578
    %v1359 = vunpack.c.l.b16 %v579
    %v1360 = vunpack.c.h.b16 %v579
    %v1361 = vunpack.c.l.b16 %v580
    %v1362 = vunpack.c.h.b16 %v580
    %v1363 = vunpack.c.l.b16 %v581
    %v1364 = vunpack.c.h.b16 %v581
    %v1365 = vunpack.c.l.b16 %v582
    %v1366 = vunpack.c.h.b16 %v582
    %v1367 = vunpack.c.l.b16 %v583
    %v1368 = vunpack.c.h.b16 %v583
    %v1369 = vunpack.c.l.b16 %v584
    %v1370 = vunpack.c.h.b16 %v584
    %v1371 = vunpack.c.l.b16 %v585
    %v1372 = vunpack.c.h.b16 %v585
    %v1373 = vunpack.c.l.b16 %v586
    %v1374 = vunpack.c.h.b16 %v586
    %v1375 = vunpack.c.l.b16 %v587
    %v1376 = vunpack.c.h.b16 %v587
    %v1377 = vunpack.c.l.b16 %v588
    %v1378 = vunpack.c.h.b16 %v588
    %v1379 = vunpack.c.l.b16 %v589
    %v1380 = vunpack.c.h.b16 %v589
    %v1381 = vunpack.c.l.b16 %v590
    %v1382 = vunpack.c.h.b16 %v590
    %v1383 = vunpack.c.l.b16 %v591
    %v1384 = vunpack.c.h.b16 %v591
    %v1385 = vunpack.c.l.b16 %v592
    %v1386 = vunpack.c.h.b16 %v592
    %v1387 = vunpack.c.l.b16 %v593
    %v1388 = vunpack.c.h.b16 %v593
    %v1389 = vunpack.c.l.b16 %v594
    %v1390 = vunpack.c.h.b16 %v594
    %v1391 = vunpack.c.l.b16 %v595
    %v1392 = vunpack.c.h.b16 %v595
    %v1393 = vunpack.c.l.b16 %v596
    %v1394 = vunpack.c.h.b16 %v596
    %v1395 = vunpack.c.l.b16 %v597
    %v1396 = vunpack.c.h.b16 %v597
    %v1397 = vunpack.c.l.b16 %v598
    %v1398 = vunpack.c.h.b16 %v598
    %v1399 = vunpack.c.l.b16 %v599
    %v1400 = vunpack.c.h.b16 %v599
    %v1401 = vunpack.c.l.b16 %v600
    %v1402 = vunpack.c.h.b16 %v600
    %v1403 = vunpack.c.l.b16 %v601
    %v1404 = vunpack.c.h.b16 %v601
    %v1405 = vunpack.c.l.b16 %v602
    %v1406 = vunpack.c.h.b16 %v602
    %v1407 = vunpack.c.l.b16 %v603
    %v1408 = vunpack.c.h.b16 %v603
    %v1409 = vunpack.c.l.b16 %v604
    %v1410 = vunpack.c.h.b16 %v604
    %v1411 = vunpack.c.l.b16 %v605
    %v1412 = vunpack.c.h.b16 %v605
    %v1413 = vunpack.c.l.b16 %v606
    %v1414 = vunpack.c.h.b16 %v606
    %v1415 = vunpack.c.l.b16 %v607
    %v1416 = vunpack.c.h.b16 %v607
    %v1417 = vunpack.c.l.b16 %v608
    %v1418 = vunpack.c.h.b16 %v608
    %v1419 = vpack.c.b16 %v915, %v907
    %v1420 = vpack.c.b16 %v916, %v908
    %v1421 = vpack.c.b16 %v917, %v909
    %v1422 = vpack.c.b16 %v918, %v910
    %v1423 = vpack.c.b16 %v919, %v911
    %v1424 = vpack.c.b16 %v920, %v912
    %v1425 = vpack.c.b16 %v921, %v913
    %v1426 = vpack.c.b16 %v922, %v914
    %v1427 = vpack.c.b16 %v931, %v923
    %v1428 = vpack.c.b16 %v932, %v924
    %v1429 = vpack.c.b16 %v933, %v925
    %v1430 = vpack.c.b16 %v934, %v926
    %v1431 = vpack.c.b16 %v935, %v927
    %v1432 = vpack.c.b16 %v936, %v928
    %v1433 = vpack.c.b16 %v937, %v929
    %v1434 = vpack.c.b16 %v938, %v930
    %v1435 = vpack.c.b16 %v947, %v939
    %v1436 = vpack.c.b16 %v948, %v940
    %v1437 = vpack.c.b16 %v949, %v941
    %v1438 = vpack.c.b16 %v950, %v942
    %v1439 = vpack.c.b16 %v951, %v943
    %v1440 = vpack.c.b16 %v952, %v944
    %v1441 = vpack.c.b16 %v953, %v945
    %v1442 = vpack.c.b16 %v954, %v946
    %v1443 = vpack.c.b16 %v963, %v955
    %v1444 = vpack.c.b16 %v964, %v956
    %v1445 = vpack.c.b16 %v965, %v957
    %v1446 = vpack.c.b16 %v966, %v958
    %v1447 = vpack.c.b16 %v967, %v959
    %v1448 = vpack.c.b16 %v968, %v960
    %v1449 = vpack.c.b16 %v969, %v961
    %v1450 = vpack.c.b16 %v970, %v962
    %v1451 = vpack.c.b16 %v979, %v971
    %v1452 = vpack.c.b16 %v980, %v972
    %v1453 = vpack.c.b16 %v981, %v973
    %v1454 = vpack.c.b16 %v982, %v974
    %v1455 = vpack.c.b16 %v983, %v975
    %v1456 = vpack.c.b16 %v984, %v976
    %v1457 = vpack.c.b16 %v985, %v977
    %v1458 = vpack.c.b16 %v986, %v978
    %v1459 = vpack.c.b16 %v995, %v987
    %v1460 = vpack.c.b16 %v996, %v988
    %v1461 = vpack.c.b16 %v997, %v989
    %v1462 = vpack.c.b16 %v998, %v990
    %v1463 = vpack.c.b16 %v999, %v991
    %v1464 = vpack.c.b16 %v1000, %v992
    %v1465 = vpack.c.b16 %v1001, %v993
    %v1466 = vpack.c.b16 %v1002, %v994
    %v1467 = vpack.c.b16 %v1011, %v1003
    %v1468 = vpack.c.b16 %v1012, %v1004
    %v1469 = vpack.c.b16 %v1013, %v1005
    %v1470 = vpack.c.b16 %v1014, %v1006
    %v1471 = vpack.c.b16 %v1015, %v1007
    %v1472 = vpack.c.b16 %v1016, %v1008
    %v1473 = vpack.c.b16 %v1017, %v1009
    %v1474 = vpack.c.b16 %v1018, %v1010
    %v1475 = vpack.c.b16 %v1027, %v1019
    %v1476 = vpack.c.b16 %v1028, %v1020
    %v1477 = vpack.c.b16 %v1029, %v1021
    %v1478 = vpack.c.b16 %v1030, %v1022
    %v1479 = vpack.c.b16 %v1031, %v1023
    %v1480 = vpack.c.b16 %v1032, %v1024
    %v1481 = vpack.c.b16 %v1033, %v1025
    %v1482 = vpack.c.b16 %v1034, %v1026
    %v1483 = vpack.c.b16 %v1043, %v1035
    %v1484 = vpack.c.b16 %v1044, %v1036
    %v1485 = vpack.c.b16 %v1045, %v1037
    %v1486 = vpack.c.b16 %v1046, %v1038
    %v1487 = vpack.c.b16 %v1047, %v1039
    %v1488 = vpack.c.b16 %v1048, %v1040
    %v1489 = vpack.c.b16 %v1049, %v1041
    %v1490 = vpack.c.b16 %v1050, %v1042
    %v1491 = vpack.c.b16 %v1059, %v1051
    %v1492 = vpack.c.b16 %v1060, %v1052
    %v1493 = vpack.c.b16 %v1061, %v1053
    %v1494 = vpack.c.b16 %v1062, %v1054
    %v1495 = vpack.c.b16 %v1063, %v1055
    %v1496 = vpack.c.b16 %v1064, %v1056
    %v1497 = vpack.c.b16 %v1065, %v1057
    %v1498 = vpack.c.b16 %v1066, %v1058
    %v1499 = vpack.c.b16 %v1075, %v1067
    %v1500 = vpack.c.b16 %v1076, %v1068
    %v1501 = vpack.c.b16 %v1077, %v1069
    %v1502 = vpack.c.b16 %v1078, %v1070
    %v1503 = vpack.c.b16 %v1079, %v1071
    %v1504 = vpack.c.b16 %v1080, %v1072
    %v1505 = vpack.c.b16 %v1081, %v1073
    %v1506 = vpack.c.b16 %v1082, %v1074
    %v1507 = vpack.c.b16 %v1091, %v1083
    %v1508 = vpack.c.b16 %v1092, %v1084
    %v1509 = vpack.c.b16 %v1093, %v1085
    %v1510 = vpack.c.b16 %v1094, %v1086
    %v1511 = vpack.c.b16 %v1095, %v1087
    %v1512 = vpack.c.b16 %v1096, %v1088
    %v1513 = vpack.c.b16 %v1097, %v1089
    %v1514 = vpack.c.b16 %v1098, %v1090
    %v1515 = vpack.c.b16 %v1107, %v1099
    %v1516 = vpack.c.b16 %v1108, %v1100
    %v1517 = vpack.c.b16 %v1109, %v1101
    %v1518 = vpack.c.b16 %v1110, %v1102
    %v1519 = vpack.c.b16 %v1111, %v1103
    %v1520 = vpack.c.b16 %v1112, %v1104
    %v1521 = vpack.c.b16 %v1113, %v1105
    %v1522 = vpack.c.b16 %v1114, %v1106
    %v1523 = vpack.c.b16 %v1123, %v1115
    %v1524 = vpack.c.b16 %v1124, %v1116
    %v1525 = vpack.c.b16 %v1125, %v1117
    %v1526 = vpack.c.b16 %v1126, %v1118
    %v1527 = vpack.c.b16 %v1127, %v1119
    %v1528 = vpack.c.b16 %v1128, %v1120
    %v1529 = vpack.c.b16 %v1129, %v1121
    %v1530 = vpack.c.b16 %v1130, %v1122
    %v1531 = vpack.c.b16 %v1139, %v1131
    %v1532 = vpack.c.b16 %v1140, %v1132
    %v1533 = vpack.c.b16 %v1141, %v1133
    %v1534 = vpack.c.b16 %v1142, %v1134
    %v1535 = vpack.c.b16 %v1143, %v1135
    %v1536 = vpack.c.b16 %v1144, %v1136
    %v1537 = vpack.c.b16 %v1145, %v1137
    %v1538 = vpack.c.b16 %v1146, %v1138
    %v1539 = vpack.c.b16 %v1155, %v1147
    %v1540 = vpack.c.b16 %v1156, %v1148
    %v1541 = vpack.c.b16 %v1157, %v1149
    %v1542 = vpack.c.b16 %v1158, %v1150
    %v1543 = vpack.c.b16 %v1159, %v1151
    %v1544 = vpack.c.b16 %v1160, %v1152
    %v1545 = vpack.c.b16 %v1161, %v1153
    %v1546 = vpack.c.b16 %v1162, %v1154
    %v1547 = vpack.c.b16 %v1171, %v1163
    %v1548 = vpack.c.b16 %v1172, %v1164
    %v1549 = vpack.c.b16 %v1173, %v1165
    %v1550 = vpack.c.b16 %v1174, %v1166
    %v1551 = vpack.c.b16 %v1175, %v1167
    %v1552 = vpack.c.b16 %v1176, %v1168
    %v1553 = vpack.c.b16 %v1177, %v1169
    %v1554 = vpack.c.b16 %v1178, %v1170
    %v1555 = vpack.c.b16 %v1187, %v1179
    %v1556 = vpack.c.b16 %v1188, %v1180
    %v1557 = vpack.c.b16 %v1189, %v1181
    %v1558 = vpack.c.b16 %v1190, %v1182
    %v1559 = vpack.c.b16 %v1191, %v1183
    %v1560 = vpack.c.b16 %v1192, %v1184
    %v1561 = vpack.c.b16 %v1193, %v1185
    %v1562 = vpack.c.b16 %v1194, %v1186
    %v1563 = vpack.c.b16 %v1203, %v1195
    %v1564 = vpack.c.b16 %v1204, %v1196
    %v1565 = vpack.c.b16 %v1205, %v1197
    %v1566 = vpack.c.b16 %v1206, %v1198
    %v1567 = vpack.c.b16 %v1207, %v1199
    %v1568 = vpack.c.b16 %v1208, %v1200
    %v1569 = vpack.c.b16 %v1209, %v1201
    %v1570 = vpack.c.b16 %v1210, %v1202
    %v1571 = vpack.c.b16 %v1219, %v1211
    %v1572 = vpack.c.b16 %v1220, %v1212
    %v1573 = vpack.c.b16 %v1221, %v1213
    %v1574 = vpack.c.b16 %v1222, %v1214
    %v1575 = vpack.c.b16 %v1223, %v1215
    %v1576 = vpack.c.b16 %v1224, %v1216
    %v1577 = vpack.c.b16 %v1225, %v1217
    %v1578 = vpack.c.b16 %v1226, %v1218
    %v1579 = vpack.c.b16 %v1235, %v1227
    %v1580 = vpack.c.b16 %v1236, %v1228
    %v1581 = vpack.c.b16 %v1237, %v1229
    %v1582 = vpack.c.b16 %v1238, %v1230
    %v1583 = vpack.c.b16 %v1239, %v1231
    %v1584 = vpack.c.b16 %v1240, %v1232
    %v1585 = vpack.c.b16 %v1241, %v1233
    %v1586 = vpack.c.b16 %v1242, %v1234
    %v1587 = vpack.c.b16 %v1251, %v1243
    %v1588 = vpack.c.b16 %v1252, %v1244
    %v1589 = vpack.c.b16 %v1253, %v1245
    %v1590 = vpack.c.b16 %v1254, %v1246
    %v1591 = vpack.c.b16 %v1255, %v1247
    %v1592 = vpack.c.b16 %v1256, %v1248
    %v1593 = vpack.c.b16 %v1257, %v1249
    %v1594 = vpack.c.b16 %v1258, %v1250
    %v1595 = vpack.c.b16 %v1267, %v1259
    %v1596 = vpack.c.b16 %v1268, %v1260
    %v1597 = vpack.c.b16 %v1269, %v1261
    %v1598 = vpack.c.b16 %v1270, %v1262
    %v1599 = vpack.c.b16 %v1271, %v1263
    %v1600 = vpack.c.b16 %v1272, %v1264
    %v1601 = vpack.c.b16 %v1273, %v1265
    %v1602 = vpack.c.b16 %v1274, %v1266
    %v1603 = vpack.c.b16 %v1283, %v1275
    %v1604 = vpack.c.b16 %v1284, %v1276
    %v1605 = vpack.c.b16 %v1285, %v1277
    %v1606 = vpack.c.b16 %v1286, %v1278
    %v1607 = vpack.c.b16 %v1287, %v1279
    %v1608 = vpack.c.b16 %v1288, %v1280
    %v1609 = vpack.c.b16 %v1289, %v1281
    %v1610 = vpack.c.b16 %v1290, %v1282
    %v1611 = vpack.c.b16 %v1299, %v1291
    %v1612 = vpack.c.b16 %v1300, %v1292
    %v1613 = vpack.c.b16 %v1301, %v1293
    %v1614 = vpack.c.b16 %v1302, %v1294
    %v1615 = vpack.c.b16 %v1303, %v1295
    %v1616 = vpack.c.b16 %v1304, %v1296
    %v1617 = vpack.c.b16 %v1305, %v1297
    %v1618 = vpack.c.b16 %v1306, %v1298
    %v1619 = vpack.c.b16 %v1315, %v1307
    %v1620 = vpack.c.b16 %v1316, %v1308
    %v1621 = vpack.c.b16 %v1317, %v1309
    %v1622 = vpack.c.b16 %v1318, %v1310
    %v1623 = vpack.c.b16 %v1319, %v1311
    %v1624 = vpack.c.b16 %v1320, %v1312
    %v1625 = vpack.c.b16 %v1321, %v1313
    %v1626 = vpack.c.b16 %v1322, %v1314
    %v1627 = vpack.c.b16 %v1331, %v1323
    %v1628 = vpack.c.b16 %v1332, %v1324
    %v1629 = vpack.c.b16 %v1333, %v1325
    %v1630 = vpack.c.b16 %v1334, %v1326
    %v1631 = vpack.c.b16 %v1335, %v1327
    %v1632 = vpack.c.b16 %v1336, %v1328
    %v1633 = vpack.c.b16 %v1337, %v1329
    %v1634 = vpack.c.b16 %v1338, %v1330
    %v1635 = vpack.c.b16 %v1347, %v1339
    %v1636 = vpack.c.b16 %v1348, %v1340
    %v1637 = vpack.c.b16 %v1349, %v1341
    %v1638 = vpack.c.b16 %v1350, %v1342
    %v1639 = vpack.c.b16 %v1351, %v1343
    %v1640 = vpack.c.b16 %v1352, %v1344
    %v1641 = vpack.c.b16 %v1353, %v1345
    %v1642 = vpack.c.b16 %v1354, %v1346
    %v1643 = vpack.c.b16 %v1363, %v1355
    %v1644 = vpack.c.b16 %v1364, %v1356
    %v1645 = vpack.c.b16 %v1365, %v1357
    %v1646 = vpack.c.b16 %v1366, %v1358
    %v1647 = vpack.c.b16 %v1367, %v1359
    %v1648 = vpack.c.b16 %v1368, %v1360
    %v1649 = vpack.c.b16 %v1369, %v1361
    %v1650 = vpack.c.b16 %v1370, %v1362
    %v1651 = vpack.c.b16 %v1379, %v1371
    %v1652 = vpack.c.b16 %v1380, %v1372
    %v1653 = vpack.c.b16 %v1381, %v1373
    %v1654 = vpack.c.b16 %v1382, %v1374
    %v1655 = vpack.c.b16 %v1383, %v1375
    %v1656 = vpack.c.b16 %v1384, %v1376
    %v1657 = vpack.c.b16 %v1385, %v1377
    %v1658 = vpack.c.b16 %v1386, %v1378
    %v1659 = vpack.c.b16 %v1395, %v1387
    %v1660 = vpack.c.b16 %v1396, %v1388
    %v1661 = vpack.c.b16 %v1397, %v1389
    %v1662 = vpack.c.b16 %v1398, %v1390
    %v1663 = vpack.c.b16 %v1399, %v1391
    %v1664 = vpack.c.b16 %v1400, %v1392
    %v1665 = vpack.c.b16 %v1401, %v1393
    %v1666 = vpack.c.b16 %v1402, %v1394
    %v1667 = vpack.c.b16 %v1411, %v1403
    %v1668 = vpack.c.b16 %v1412, %v1404
    %v1669 = vpack.c.b16 %v1413, %v1405
    %v1670 = vpack.c.b16 %v1414, %v1406
    %v1671 = vpack.c.b16 %v1415, %v1407
    %v1672 = vpack.c.b16 %v1416, %v1408
    %v1673 = vpack.c.b16 %v1417, %v1409
    %v1674 = vpack.c.b16 %v1418, %v1410
    %1931 = vmatprep.subr.bf16.mxu0 %v1420
    %1932 = vmatpush1.bf16.msra.mxu0 %v1419
    %1933 = vmatprep.subr.bf16.mxu0 %v1428
    %1934 = vmatpush1.bf16.msra.mxu0 %v1427
    %1935 = vmatprep.subr.bf16.mxu0 %v1436
    %1936 = vmatpush1.bf16.msra.mxu0 %v1435
    %1937 = vmatprep.subr.bf16.mxu0 %v1444
    %1938 = vmatpush1.bf16.msra.mxu0 %v1443
    %1939 = vmatprep.subr.bf16.mxu0 %v1452
    %1940 = vmatpush1.bf16.msra.mxu0 %v1451
    %1941 = vmatprep.subr.bf16.mxu0 %v1460
    %1942 = vmatpush1.bf16.msra.mxu0 %v1459
    %1943 = vmatprep.subr.bf16.mxu0 %v1468
    %1944 = vmatpush1.bf16.msra.mxu0 %v1467
    %1945 = vmatprep.subr.bf16.mxu0 %v1476
    %1946 = vmatpush1.bf16.msra.mxu0 %v1475
    %1947 = vmatprep.subr.bf16.mxu0 %v1484
    %1948 = vmatpush1.bf16.msra.mxu0 %v1483
    %1949 = vmatprep.subr.bf16.mxu0 %v1492
    %1950 = vmatpush1.bf16.msra.mxu0 %v1491
    %1951 = vmatprep.subr.bf16.mxu0 %v1500
    %1952 = vmatpush1.bf16.msra.mxu0 %v1499
    %1953 = vmatprep.subr.bf16.mxu0 %v1508
    %1954 = vmatpush1.bf16.msra.mxu0 %v1507
    %1955 = vmatprep.subr.bf16.mxu0 %v1516
    %1956 = vmatpush1.bf16.msra.mxu0 %v1515
    %1957 = vmatprep.subr.bf16.mxu0 %v1524
    %1958 = vmatpush1.bf16.msra.mxu0 %v1523
    %1959 = vmatprep.subr.bf16.mxu0 %v1532
    %1960 = vmatpush1.bf16.msra.mxu0 %v1531
    %1961 = vmatprep.subr.bf16.mxu0 %v1540
    %1962 = vmatpush1.bf16.msra.mxu0 %v1539
    %1963 = vmatprep.mubr.bf16.mxu0 %v350
    %1964 = vmatmul.mubr.bf16.gmra.mrb[0].mxu0 %v349
    %v1965 = vpop.f32.mrb[0].mxu0
    %v1966 = vadd.f32 %v614, %v1965
    %v1967 = vpop.f32.mrb[0].mxu0
    %v1968 = vadd.f32 %v618, %v1967
    %v1969 = vpop.f32.mrb[0].mxu0
    %v1970 = vpop.f32.mrb[0].mxu0
    %1971 = vdwg.mxu0
    %1972 = vmatprep.subr.bf16.mxu0 %v1548
    %1973 = vmatpush1.bf16.msra.mxu0 %v1547
    %1974 = vmatprep.subr.bf16.mxu0 %v1556
    %1975 = vmatpush1.bf16.msra.mxu0 %v1555
    %1976 = vmatprep.subr.bf16.mxu0 %v1564
    %1977 = vmatpush1.bf16.msra.mxu0 %v1563
    %1978 = vmatprep.subr.bf16.mxu0 %v1572
    %1979 = vmatpush1.bf16.msra.mxu0 %v1571
    %1980 = vmatprep.subr.bf16.mxu0 %v1580
    %1981 = vmatpush1.bf16.msra.mxu0 %v1579
    %1982 = vmatprep.subr.bf16.mxu0 %v1588
    %1983 = vmatpush1.bf16.msra.mxu0 %v1587
    %1984 = vmatprep.subr.bf16.mxu0 %v1596
    %1985 = vmatpush1.bf16.msra.mxu0 %v1595
    %1986 = vmatprep.subr.bf16.mxu0 %v1604
    %1987 = vmatpush1.bf16.msra.mxu0 %v1603
    %1988 = vmatprep.subr.bf16.mxu0 %v1612
    %1989 = vmatpush1.bf16.msra.mxu0 %v1611
    %1990 = vmatprep.subr.bf16.mxu0 %v1620
    %1991 = vmatpush1.bf16.msra.mxu0 %v1619
    %1992 = vmatprep.subr.bf16.mxu0 %v1628
    %1993 = vmatpush1.bf16.msra.mxu0 %v1627
    %1994 = vmatprep.subr.bf16.mxu0 %v1636
    %1995 = vmatpush1.bf16.msra.mxu0 %v1635
    %1996 = vmatprep.subr.bf16.mxu0 %v1644
    %1997 = vmatpush1.bf16.msra.mxu0 %v1643
    %1998 = vmatprep.subr.bf16.mxu0 %v1652
    %1999 = vmatpush1.bf16.msra.mxu0 %v1651
    %2000 = vmatprep.subr.bf16.mxu0 %v1660
    %2001 = vmatpush1.bf16.msra.mxu0 %v1659
    %2002 = vmatprep.subr.bf16.mxu0 %v1668
    %2003 = vmatpush1.bf16.msra.mxu0 %v1667
    %2004 = vmatprep.mubr.bf16.mxu0 %v352
    %2005 = vmatmul.mubr.bf16.gmra.mrb[0].mxu0 %v351
    %v2006 = vpop.f32.mrb[0].mxu0
    %v2007 = vadd.f32 %v1966, %v2006
    %v2008 = vpop.f32.mrb[0].mxu0
    %v2009 = vadd.f32 %v1968, %v2008
    %v2010 = vpop.f32.mrb[0].mxu0
    %v2011 = vpop.f32.mrb[0].mxu0
    %2012 = vdwg.mxu0
    %2013 = vmatprep.subr.bf16.mxu0 %v1422
    %2014 = vmatpush1.bf16.msra.mxu0 %v1421
    %2015 = vmatprep.subr.bf16.mxu0 %v1430
    %2016 = vmatpush1.bf16.msra.mxu0 %v1429
    %2017 = vmatprep.subr.bf16.mxu0 %v1438
    %2018 = vmatpush1.bf16.msra.mxu0 %v1437
    %2019 = vmatprep.subr.bf16.mxu0 %v1446
    %2020 = vmatpush1.bf16.msra.mxu0 %v1445
    %2021 = vmatprep.subr.bf16.mxu0 %v1454
    %2022 = vmatpush1.bf16.msra.mxu0 %v1453
    %2023 = vmatprep.subr.bf16.mxu0 %v1462
    %2024 = vmatpush1.bf16.msra.mxu0 %v1461
    %2025 = vmatprep.subr.bf16.mxu0 %v1470
    %2026 = vmatpush1.bf16.msra.mxu0 %v1469
    %2027 = vmatprep.subr.bf16.mxu0 %v1478
    %2028 = vmatpush1.bf16.msra.mxu0 %v1477
    %2029 = vmatprep.subr.bf16.mxu0 %v1486
    %2030 = vmatpush1.bf16.msra.mxu0 %v1485
    %2031 = vmatprep.subr.bf16.mxu0 %v1494
    %2032 = vmatpush1.bf16.msra.mxu0 %v1493
    %2033 = vmatprep.subr.bf16.mxu0 %v1502
    %2034 = vmatpush1.bf16.msra.mxu0 %v1501
    %2035 = vmatprep.subr.bf16.mxu0 %v1510
    %2036 = vmatpush1.bf16.msra.mxu0 %v1509
    %2037 = vmatprep.subr.bf16.mxu0 %v1518
    %2038 = vmatpush1.bf16.msra.mxu0 %v1517
    %2039 = vmatprep.subr.bf16.mxu0 %v1526
    %2040 = vmatpush1.bf16.msra.mxu0 %v1525
    %2041 = vmatprep.subr.bf16.mxu0 %v1534
    %2042 = vmatpush1.bf16.msra.mxu0 %v1533
    %2043 = vmatprep.subr.bf16.mxu0 %v1542
    %2044 = vmatpush1.bf16.msra.mxu0 %v1541
    %2045 = vmatprep.mubr.bf16.mxu0 %v350
    %2046 = vmatmul.mubr.bf16.gmra.mrb[0].mxu0 %v349
    %v2047 = vpop.f32.mrb[0].mxu0
    %v2048 = vadd.f32 %v622, %v2047
    %v2049 = vpop.f32.mrb[0].mxu0
    %v2050 = vadd.f32 %v626, %v2049
    %v2051 = vpop.f32.mrb[0].mxu0
    %v2052 = vpop.f32.mrb[0].mxu0
    %2053 = vdwg.mxu0
    %2054 = vmatprep.subr.bf16.mxu0 %v1550
    %2055 = vmatpush1.bf16.msra.mxu0 %v1549
    %2056 = vmatprep.subr.bf16.mxu0 %v1558
    %2057 = vmatpush1.bf16.msra.mxu0 %v1557
    %2058 = vmatprep.subr.bf16.mxu0 %v1566
    %2059 = vmatpush1.bf16.msra.mxu0 %v1565
    %2060 = vmatprep.subr.bf16.mxu0 %v1574
    %2061 = vmatpush1.bf16.msra.mxu0 %v1573
    %2062 = vmatprep.subr.bf16.mxu0 %v1582
    %2063 = vmatpush1.bf16.msra.mxu0 %v1581
    %2064 = vmatprep.subr.bf16.mxu0 %v1590
    %2065 = vmatpush1.bf16.msra.mxu0 %v1589
    %2066 = vmatprep.subr.bf16.mxu0 %v1598
    %2067 = vmatpush1.bf16.msra.mxu0 %v1597
    %2068 = vmatprep.subr.bf16.mxu0 %v1606
    %2069 = vmatpush1.bf16.msra.mxu0 %v1605
    %2070 = vmatprep.subr.bf16.mxu0 %v1614
    %2071 = vmatpush1.bf16.msra.mxu0 %v1613
    %2072 = vmatprep.subr.bf16.mxu0 %v1622
    %2073 = vmatpush1.bf16.msra.mxu0 %v1621
    %2074 = vmatprep.subr.bf16.mxu0 %v1630
    %2075 = vmatpush1.bf16.msra.mxu0 %v1629
    %2076 = vmatprep.subr.bf16.mxu0 %v1638
    %2077 = vmatpush1.bf16.msra.mxu0 %v1637
    %2078 = vmatprep.subr.bf16.mxu0 %v1646
    %2079 = vmatpush1.bf16.msra.mxu0 %v1645
    %2080 = vmatprep.subr.bf16.mxu0 %v1654
    %2081 = vmatpush1.bf16.msra.mxu0 %v1653
    %2082 = vmatprep.subr.bf16.mxu0 %v1662
    %2083 = vmatpush1.bf16.msra.mxu0 %v1661
    %2084 = vmatprep.subr.bf16.mxu0 %v1670
    %2085 = vmatpush1.bf16.msra.mxu0 %v1669
    %2086 = vmatprep.mubr.bf16.mxu0 %v352
    %2087 = vmatmul.mubr.bf16.gmra.mrb[0].mxu0 %v351
    %v2088 = vpop.f32.mrb[0].mxu0
    %v2089 = vadd.f32 %v2048, %v2088
    %v2090 = vpop.f32.mrb[0].mxu0
    %v2091 = vadd.f32 %v2050, %v2090
    %v2092 = vpop.f32.mrb[0].mxu0
    %v2093 = vpop.f32.mrb[0].mxu0
    %2094 = vdwg.mxu0
    %2095 = vmatprep.subr.bf16.mxu0 %v1424
    %2096 = vmatpush1.bf16.msra.mxu0 %v1423
    %2097 = vmatprep.subr.bf16.mxu0 %v1432
    %2098 = vmatpush1.bf16.msra.mxu0 %v1431
    %2099 = vmatprep.subr.bf16.mxu0 %v1440
    %2100 = vmatpush1.bf16.msra.mxu0 %v1439
    %2101 = vmatprep.subr.bf16.mxu0 %v1448
    %2102 = vmatpush1.bf16.msra.mxu0 %v1447
    %2103 = vmatprep.subr.bf16.mxu0 %v1456
    %2104 = vmatpush1.bf16.msra.mxu0 %v1455
    %2105 = vmatprep.subr.bf16.mxu0 %v1464
    %2106 = vmatpush1.bf16.msra.mxu0 %v1463
    %2107 = vmatprep.subr.bf16.mxu0 %v1472
    %2108 = vmatpush1.bf16.msra.mxu0 %v1471
    %2109 = vmatprep.subr.bf16.mxu0 %v1480
    %2110 = vmatpush1.bf16.msra.mxu0 %v1479
    %2111 = vmatprep.subr.bf16.mxu0 %v1488
    %2112 = vmatpush1.bf16.msra.mxu0 %v1487
    %2113 = vmatprep.subr.bf16.mxu0 %v1496
    %2114 = vmatpush1.bf16.msra.mxu0 %v1495
    %2115 = vmatprep.subr.bf16.mxu0 %v1504
    %2116 = vmatpush1.bf16.msra.mxu0 %v1503
    %2117 = vmatprep.subr.bf16.mxu0 %v1512
    %2118 = vmatpush1.bf16.msra.mxu0 %v1511
    %2119 = vmatprep.subr.bf16.mxu0 %v1520
    %2120 = vmatpush1.bf16.msra.mxu0 %v1519
    %2121 = vmatprep.subr.bf16.mxu0 %v1528
    %2122 = vmatpush1.bf16.msra.mxu0 %v1527
    %2123 = vmatprep.subr.bf16.mxu0 %v1536
    %2124 = vmatpush1.bf16.msra.mxu0 %v1535
    %2125 = vmatprep.subr.bf16.mxu0 %v1544
    %2126 = vmatpush1.bf16.msra.mxu0 %v1543
    %2127 = vmatprep.mubr.bf16.mxu0 %v350
    %2128 = vmatmul.mubr.bf16.gmra.mrb[0].mxu0 %v349
    %v2129 = vpop.f32.mrb[0].mxu0
    %v2130 = vadd.f32 %v630, %v2129
    %v2131 = vpop.f32.mrb[0].mxu0
    %v2132 = vadd.f32 %v634, %v2131
    %v2133 = vpop.f32.mrb[0].mxu0
    %v2134 = vpop.f32.mrb[0].mxu0
    %2135 = vdwg.mxu0
    %2136 = vmatprep.subr.bf16.mxu0 %v1552
    %2137 = vmatpush1.bf16.msra.mxu0 %v1551
    %2138 = vmatprep.subr.bf16.mxu0 %v1560
    %2139 = vmatpush1.bf16.msra.mxu0 %v1559
    %2140 = vmatprep.subr.bf16.mxu0 %v1568
    %2141 = vmatpush1.bf16.msra.mxu0 %v1567
    %2142 = vmatprep.subr.bf16.mxu0 %v1576
    %2143 = vmatpush1.bf16.msra.mxu0 %v1575
    %2144 = vmatprep.subr.bf16.mxu0 %v1584
    %2145 = vmatpush1.bf16.msra.mxu0 %v1583
    %2146 = vmatprep.subr.bf16.mxu0 %v1592
    %2147 = vmatpush1.bf16.msra.mxu0 %v1591
    %2148 = vmatprep.subr.bf16.mxu0 %v1600
    %2149 = vmatpush1.bf16.msra.mxu0 %v1599
    %2150 = vmatprep.subr.bf16.mxu0 %v1608
    %2151 = vmatpush1.bf16.msra.mxu0 %v1607
    %2152 = vmatprep.subr.bf16.mxu0 %v1616
    %2153 = vmatpush1.bf16.msra.mxu0 %v1615
    %2154 = vmatprep.subr.bf16.mxu0 %v1624
    %2155 = vmatpush1.bf16.msra.mxu0 %v1623
    %2156 = vmatprep.subr.bf16.mxu0 %v1632
    %2157 = vmatpush1.bf16.msra.mxu0 %v1631
    %2158 = vmatprep.subr.bf16.mxu0 %v1640
    %2159 = vmatpush1.bf16.msra.mxu0 %v1639
    %2160 = vmatprep.subr.bf16.mxu0 %v1648
    %2161 = vmatpush1.bf16.msra.mxu0 %v1647
    %2162 = vmatprep.subr.bf16.mxu0 %v1656
    %2163 = vmatpush1.bf16.msra.mxu0 %v1655
    %2164 = vmatprep.subr.bf16.mxu0 %v1664
    %2165 = vmatpush1.bf16.msra.mxu0 %v1663
    %2166 = vmatprep.subr.bf16.mxu0 %v1672
    %2167 = vmatpush1.bf16.msra.mxu0 %v1671
    %2168 = vmatprep.mubr.bf16.mxu0 %v352
    %2169 = vmatmul.mubr.bf16.gmra.mrb[0].mxu0 %v351
    %v2170 = vpop.f32.mrb[0].mxu0
    %v2171 = vadd.f32 %v2130, %v2170
    %v2172 = vpop.f32.mrb[0].mxu0
    %v2173 = vadd.f32 %v2132, %v2172
    %v2174 = vpop.f32.mrb[0].mxu0
    %v2175 = vpop.f32.mrb[0].mxu0
    %2176 = vdwg.mxu0
    %2177 = vmatprep.subr.bf16.mxu0 %v1426
    %2178 = vmatpush1.bf16.msra.mxu0 %v1425
    %2179 = vmatprep.subr.bf16.mxu0 %v1434
    %2180 = vmatpush1.bf16.msra.mxu0 %v1433
    %2181 = vmatprep.subr.bf16.mxu0 %v1442
    %2182 = vmatpush1.bf16.msra.mxu0 %v1441
    %2183 = vmatprep.subr.bf16.mxu0 %v1450
    %2184 = vmatpush1.bf16.msra.mxu0 %v1449
    %2185 = vmatprep.subr.bf16.mxu0 %v1458
    %2186 = vmatpush1.bf16.msra.mxu0 %v1457
    %2187 = vmatprep.subr.bf16.mxu0 %v1466
    %2188 = vmatpush1.bf16.msra.mxu0 %v1465
    %2189 = vmatprep.subr.bf16.mxu0 %v1474
    %2190 = vmatpush1.bf16.msra.mxu0 %v1473
    %2191 = vmatprep.subr.bf16.mxu0 %v1482
    %2192 = vmatpush1.bf16.msra.mxu0 %v1481
    %2193 = vmatprep.subr.bf16.mxu0 %v1490
    %2194 = vmatpush1.bf16.msra.mxu0 %v1489
    %2195 = vmatprep.subr.bf16.mxu0 %v1498
    %2196 = vmatpush1.bf16.msra.mxu0 %v1497
    %2197 = vmatprep.subr.bf16.mxu0 %v1506
    %2198 = vmatpush1.bf16.msra.mxu0 %v1505
    %2199 = vmatprep.subr.bf16.mxu0 %v1514
    %2200 = vmatpush1.bf16.msra.mxu0 %v1513
    %2201 = vmatprep.subr.bf16.mxu0 %v1522
    %2202 = vmatpush1.bf16.msra.mxu0 %v1521
    %2203 = vmatprep.subr.bf16.mxu0 %v1530
    %2204 = vmatpush1.bf16.msra.mxu0 %v1529
    %2205 = vmatprep.subr.bf16.mxu0 %v1538
    %2206 = vmatpush1.bf16.msra.mxu0 %v1537
    %2207 = vmatprep.subr.bf16.mxu0 %v1546
    %2208 = vmatpush1.bf16.msra.mxu0 %v1545
    %2209 = vmatprep.mubr.bf16.mxu0 %v350
    %2210 = vmatmul.mubr.bf16.gmra.mrb[0].mxu0 %v349
    %v2211 = vpop.f32.mrb[0].mxu0
    %v2212 = vadd.f32 %v638, %v2211
    %v2213 = vpop.f32.mrb[0].mxu0
    %v2214 = vadd.f32 %v642, %v2213
    %v2215 = vpop.f32.mrb[0].mxu0
    %v2216 = vpop.f32.mrb[0].mxu0
    %2217 = vdwg.mxu0
    %2218 = vmatprep.subr.bf16.mxu0 %v1554
    %2219 = vmatpush1.bf16.msra.mxu0 %v1553
    %2220 = vmatprep.subr.bf16.mxu0 %v1562
    %2221 = vmatpush1.bf16.msra.mxu0 %v1561
    %2222 = vmatprep.subr.bf16.mxu0 %v1570
    %2223 = vmatpush1.bf16.msra.mxu0 %v1569
    %2224 = vmatprep.subr.bf16.mxu0 %v1578
    %2225 = vmatpush1.bf16.msra.mxu0 %v1577
    %2226 = vmatprep.subr.bf16.mxu0 %v1586
    %2227 = vmatpush1.bf16.msra.mxu0 %v1585
    %2228 = vmatprep.subr.bf16.mxu0 %v1594
    %2229 = vmatpush1.bf16.msra.mxu0 %v1593
    %2230 = vmatprep.subr.bf16.mxu0 %v1602
    %2231 = vmatpush1.bf16.msra.mxu0 %v1601
    %2232 = vmatprep.subr.bf16.mxu0 %v1610
    %2233 = vmatpush1.bf16.msra.mxu0 %v1609
    %2234 = vmatprep.subr.bf16.mxu0 %v1618
    %2235 = vmatpush1.bf16.msra.mxu0 %v1617
    %2236 = vmatprep.subr.bf16.mxu0 %v1626
    %2237 = vmatpush1.bf16.msra.mxu0 %v1625
    %2238 = vmatprep.subr.bf16.mxu0 %v1634
    %2239 = vmatpush1.bf16.msra.mxu0 %v1633
    %2240 = vmatprep.subr.bf16.mxu0 %v1642
    %2241 = vmatpush1.bf16.msra.mxu0 %v1641
    %2242 = vmatprep.subr.bf16.mxu0 %v1650
    %2243 = vmatpush1.bf16.msra.mxu0 %v1649
    %2244 = vmatprep.subr.bf16.mxu0 %v1658
    %2245 = vmatpush1.bf16.msra.mxu0 %v1657
    %2246 = vmatprep.subr.bf16.mxu0 %v1666
    %2247 = vmatpush1.bf16.msra.mxu0 %v1665
    %2248 = vmatprep.subr.bf16.mxu0 %v1674
    %2249 = vmatpush1.bf16.msra.mxu0 %v1673
    %2250 = vmatprep.mubr.bf16.mxu0 %v352
    %2251 = vmatmul.mubr.bf16.gmra.mrb[0].mxu0 %v351
    %v2252 = vpop.f32.mrb[0].mxu0
    %v2253 = vadd.f32 %v2212, %v2252
    %v2254 = vpop.f32.mrb[0].mxu0
    %v2255 = vadd.f32 %v2214, %v2254
    %v2256 = vpop.f32.mrb[0].mxu0
    %v2257 = vpop.f32.mrb[0].mxu0
    %2258 = vdwg.mxu0
    %v2259 = vtanh.pop %v2007
    %v2260 = vtanh.pop %v2009
    %v2261 = vtanh.pop %v2089
    %v2262 = vtanh.pop %v2091
    %v2267 = vcombine.low %v2259, %v2260
    %v2268 = vcombine.high %v2259, %v2260
    %v2269 = vcombine.low %v2261, %v2262
    %v2270 = vcombine.high %v2261, %v2262
    %v2279 = vcombine.low %v2171, %v2173
    %v2280 = vcombine.high %v2171, %v2173
    %v2281 = vcombine.low %v2253, %v2255
    %v2282 = vcombine.high %v2253, %v2255
    %v2287 = vcombine.high %v2267, %v2267
    %v2288 = vcombine.high %v2269, %v2269
    %v2289 = vcombine.high %v2268, %v2268
    %v2290 = vcombine.high %v2270, %v2270
    %vm2295 = vcmask 1043456
    %v2296 = vsel %vm2295, %v2267, -inf
    %v2297 = vrot.slane %v2296, 4
    %v2298 = vmax.f32 %v2296, %v2297
    %v2299 = vrot.slane %v2298, 2
    %v2300 = vmax.f32 %v2298, %v2299
    %v2301 = vrot.slane %v2300, 1
    %v2302 = vmax.f32 %v2300, %v2301
    %v2303 = vsel %vm2295, %v2287, -inf
    %v2304 = vrot.slane %v2303, 4
    %v2305 = vmax.f32 %v2303, %v2304
    %v2306 = vrot.slane %v2305, 2
    %v2307 = vmax.f32 %v2305, %v2306
    %v2308 = vrot.slane %v2307, 1
    %v2309 = vmax.f32 %v2307, %v2308
    %v2310 = vsel %vm2295, %v2269, -inf
    %v2311 = vrot.slane %v2310, 4
    %v2312 = vmax.f32 %v2310, %v2311
    %v2313 = vrot.slane %v2312, 2
    %v2314 = vmax.f32 %v2312, %v2313
    %v2315 = vrot.slane %v2314, 1
    %v2316 = vmax.f32 %v2314, %v2315
    %v2317 = vsel %vm2295, %v2288, -inf
    %v2318 = vrot.slane %v2317, 4
    %v2319 = vmax.f32 %v2317, %v2318
    %v2320 = vrot.slane %v2319, 2
    %v2321 = vmax.f32 %v2319, %v2320
    %v2322 = vrot.slane %v2321, 1
    %v2323 = vmax.f32 %v2321, %v2322
    %v2324 = vsel %vm2295, %v2268, -inf
    %v2325 = vrot.slane %v2324, 4
    %v2326 = vmax.f32 %v2324, %v2325
    %v2327 = vrot.slane %v2326, 2
    %v2328 = vmax.f32 %v2326, %v2327
    %v2329 = vrot.slane %v2328, 1
    %v2330 = vmax.f32 %v2328, %v2329
    %v2331 = vsel %vm2295, %v2289, -inf
    %v2332 = vrot.slane %v2331, 4
    %v2333 = vmax.f32 %v2331, %v2332
    %v2334 = vrot.slane %v2333, 2
    %v2335 = vmax.f32 %v2333, %v2334
    %v2336 = vrot.slane %v2335, 1
    %v2337 = vmax.f32 %v2335, %v2336
    %v2338 = vsel %vm2295, %v2270, -inf
    %v2339 = vrot.slane %v2338, 4
    %v2340 = vmax.f32 %v2338, %v2339
    %v2341 = vrot.slane %v2340, 2
    %v2342 = vmax.f32 %v2340, %v2341
    %v2343 = vrot.slane %v2342, 1
    %v2344 = vmax.f32 %v2342, %v2343
    %v2345 = vsel %vm2295, %v2290, -inf
    %v2346 = vrot.slane %v2345, 4
    %v2347 = vmax.f32 %v2345, %v2346
    %v2348 = vrot.slane %v2347, 2
    %v2349 = vmax.f32 %v2347, %v2348
    %v2350 = vrot.slane %v2349, 1
    %v2351 = vmax.f32 %v2349, %v2350
    %v2360 = vcombine.low %v2302, %v2309
    %v2361 = vcombine.low %v2316, %v2323
    %v2362 = vcombine.low %v2330, %v2337
    %v2363 = vcombine.low %v2344, %v2351
    %v2368 = vsub.f32 %v2267, %v2360
    %v2369 = vsub.f32 %v2269, %v2361
    %v2370 = vsub.f32 %v2268, %v2362
    %v2371 = vsub.f32 %v2270, %v2363
    %v2372 = vmul.f32 %v2368, 1.442695
    %v2373 = vpow.pop %v2372
    %v2374 = vmul.f32 %v2369, 1.442695
    %v2375 = vpow.pop %v2374
    %v2376 = vmul.f32 %v2370, 1.442695
    %v2377 = vpow.pop %v2376
    %v2378 = vmul.f32 %v2371, 1.442695
    %v2379 = vpow.pop %v2378
    %v2384 = vcombine.high %v2373, %v2373
    %v2385 = vcombine.high %v2375, %v2375
    %v2386 = vcombine.high %v2377, %v2377
    %v2387 = vcombine.high %v2379, %v2379
    %v2392 = vsel %vm2295, %v2373, 0.0
    %v2393 = vrot.slane %v2392, 4
    %v2394 = vadd.f32 %v2392, %v2393
    %v2395 = vrot.slane %v2394, 2
    %v2396 = vadd.f32 %v2394, %v2395
    %v2397 = vrot.slane %v2396, 1
    %v2398 = vadd.f32 %v2396, %v2397
    %v2399 = vsel %vm2295, %v2384, 0.0
    %v2400 = vrot.slane %v2399, 4
    %v2401 = vadd.f32 %v2399, %v2400
    %v2402 = vrot.slane %v2401, 2
    %v2403 = vadd.f32 %v2401, %v2402
    %v2404 = vrot.slane %v2403, 1
    %v2405 = vadd.f32 %v2403, %v2404
    %v2406 = vsel %vm2295, %v2375, 0.0
    %v2407 = vrot.slane %v2406, 4
    %v2408 = vadd.f32 %v2406, %v2407
    %v2409 = vrot.slane %v2408, 2
    %v2410 = vadd.f32 %v2408, %v2409
    %v2411 = vrot.slane %v2410, 1
    %v2412 = vadd.f32 %v2410, %v2411
    %v2413 = vsel %vm2295, %v2385, 0.0
    %v2414 = vrot.slane %v2413, 4
    %v2415 = vadd.f32 %v2413, %v2414
    %v2416 = vrot.slane %v2415, 2
    %v2417 = vadd.f32 %v2415, %v2416
    %v2418 = vrot.slane %v2417, 1
    %v2419 = vadd.f32 %v2417, %v2418
    %v2420 = vsel %vm2295, %v2377, 0.0
    %v2421 = vrot.slane %v2420, 4
    %v2422 = vadd.f32 %v2420, %v2421
    %v2423 = vrot.slane %v2422, 2
    %v2424 = vadd.f32 %v2422, %v2423
    %v2425 = vrot.slane %v2424, 1
    %v2426 = vadd.f32 %v2424, %v2425
    %v2427 = vsel %vm2295, %v2386, 0.0
    %v2428 = vrot.slane %v2427, 4
    %v2429 = vadd.f32 %v2427, %v2428
    %v2430 = vrot.slane %v2429, 2
    %v2431 = vadd.f32 %v2429, %v2430
    %v2432 = vrot.slane %v2431, 1
    %v2433 = vadd.f32 %v2431, %v2432
    %v2434 = vsel %vm2295, %v2379, 0.0
    %v2435 = vrot.slane %v2434, 4
    %v2436 = vadd.f32 %v2434, %v2435
    %v2437 = vrot.slane %v2436, 2
    %v2438 = vadd.f32 %v2436, %v2437
    %v2439 = vrot.slane %v2438, 1
    %v2440 = vadd.f32 %v2438, %v2439
    %v2441 = vsel %vm2295, %v2387, 0.0
    %v2442 = vrot.slane %v2441, 4
    %v2443 = vadd.f32 %v2441, %v2442
    %v2444 = vrot.slane %v2443, 2
    %v2445 = vadd.f32 %v2443, %v2444
    %v2446 = vrot.slane %v2445, 1
    %v2447 = vadd.f32 %v2445, %v2446
    %v2448 = vrcp.pop %v2398
    %v2449 = vrcp.pop %v2405
    %v2450 = vrcp.pop %v2412
    %v2451 = vrcp.pop %v2419
    %v2452 = vrcp.pop %v2426
    %v2453 = vrcp.pop %v2433
    %v2454 = vrcp.pop %v2440
    %v2455 = vrcp.pop %v2447
    %v2464 = vcombine.low %v2448, %v2449
    %v2465 = vcombine.low %v2450, %v2451
    %v2466 = vcombine.low %v2452, %v2453
    %v2467 = vcombine.low %v2454, %v2455
    %v2472 = vmul.f32 %v2373, %v2464
    %v2473 = vmul.f32 %v2375, %v2465
    %v2474 = vmul.f32 %v2377, %v2466
    %v2475 = vmul.f32 %v2379, %v2467
    %v2476 = vmul.f32 %v2279, %v2472
    %v2477 = vmul.f32 %v2281, %v2473
    %v2478 = vmul.f32 %v2280, %v2474
    %v2479 = vmul.f32 %v2282, %v2475
    %v2484 = vcombine.high %v2476, %v2476
    %v2485 = vcombine.high %v2477, %v2477
    %v2486 = vcombine.high %v2478, %v2478
    %v2487 = vcombine.high %v2479, %v2479
    %v2492 = vsel %vm2295, %v2476, 0.0
    %v2493 = vrot.slane %v2492, 4
    %v2494 = vadd.f32 %v2492, %v2493
    %v2495 = vrot.slane %v2494, 2
    %v2496 = vadd.f32 %v2494, %v2495
    %v2497 = vrot.slane %v2496, 1
    %v2498 = vadd.f32 %v2496, %v2497
    %v2499 = vsel %vm2295, %v2484, 0.0
    %v2500 = vrot.slane %v2499, 4
    %v2501 = vadd.f32 %v2499, %v2500
    %v2502 = vrot.slane %v2501, 2
    %v2503 = vadd.f32 %v2501, %v2502
    %v2504 = vrot.slane %v2503, 1
    %v2505 = vadd.f32 %v2503, %v2504
    %v2506 = vsel %vm2295, %v2477, 0.0
    %v2507 = vrot.slane %v2506, 4
    %v2508 = vadd.f32 %v2506, %v2507
    %v2509 = vrot.slane %v2508, 2
    %v2510 = vadd.f32 %v2508, %v2509
    %v2511 = vrot.slane %v2510, 1
    %v2512 = vadd.f32 %v2510, %v2511
    %v2513 = vsel %vm2295, %v2485, 0.0
    %v2514 = vrot.slane %v2513, 4
    %v2515 = vadd.f32 %v2513, %v2514
    %v2516 = vrot.slane %v2515, 2
    %v2517 = vadd.f32 %v2515, %v2516
    %v2518 = vrot.slane %v2517, 1
    %v2519 = vadd.f32 %v2517, %v2518
    %v2520 = vsel %vm2295, %v2478, 0.0
    %v2521 = vrot.slane %v2520, 4
    %v2522 = vadd.f32 %v2520, %v2521
    %v2523 = vrot.slane %v2522, 2
    %v2524 = vadd.f32 %v2522, %v2523
    %v2525 = vrot.slane %v2524, 1
    %v2526 = vadd.f32 %v2524, %v2525
    %v2527 = vsel %vm2295, %v2486, 0.0
    %v2528 = vrot.slane %v2527, 4
    %v2529 = vadd.f32 %v2527, %v2528
    %v2530 = vrot.slane %v2529, 2
    %v2531 = vadd.f32 %v2529, %v2530
    %v2532 = vrot.slane %v2531, 1
    %v2533 = vadd.f32 %v2531, %v2532
    %v2534 = vsel %vm2295, %v2479, 0.0
    %v2535 = vrot.slane %v2534, 4
    %v2536 = vadd.f32 %v2534, %v2535
    %v2537 = vrot.slane %v2536, 2
    %v2538 = vadd.f32 %v2536, %v2537
    %v2539 = vrot.slane %v2538, 1
    %v2540 = vadd.f32 %v2538, %v2539
    %v2541 = vsel %vm2295, %v2487, 0.0
    %v2542 = vrot.slane %v2541, 4
    %v2543 = vadd.f32 %v2541, %v2542
    %v2544 = vrot.slane %v2543, 2
    %v2545 = vadd.f32 %v2543, %v2544
    %v2546 = vrot.slane %v2545, 1
    %v2547 = vadd.f32 %v2545, %v2546
    %v2548 = vxor.u32 %v2279, 2147483648
    %v2549 = vxor.u32 %v2281, 2147483648
    %v2550 = vxor.u32 %v2280, 2147483648
    %v2551 = vxor.u32 %v2282, 2147483648
    %v2552 = vmul.f32 %v2548, 1.442695
    %v2553 = vpow.pop %v2552
    %v2554 = vmul.f32 %v2549, 1.442695
    %v2555 = vpow.pop %v2554
    %v2556 = vmul.f32 %v2550, 1.442695
    %v2557 = vpow.pop %v2556
    %v2558 = vmul.f32 %v2551, 1.442695
    %v2559 = vpow.pop %v2558
    %v2560 = vadd.f32 %v2553, 1.0
    %v2561 = vadd.f32 %v2555, 1.0
    %v2562 = vadd.f32 %v2557, 1.0
    %v2563 = vadd.f32 %v2559, 1.0
    %v2564 = vrcp.pop %v2560
    %v2565 = vmul.f32 1.0, %v2564
    %v2566 = vrcp.pop %v2561
    %v2567 = vmul.f32 1.0, %v2566
    %v2568 = vrcp.pop %v2562
    %v2569 = vmul.f32 1.0, %v2568
    %v2570 = vrcp.pop %v2563
    %v2571 = vmul.f32 1.0, %v2570
    %v2572 = vmul.f32 %v2565, %v2472
    %v2573 = vmul.f32 %v2567, %v2473
    %v2574 = vmul.f32 %v2569, %v2474
    %v2575 = vmul.f32 %v2571, %v2475
    %v2580 = vcombine.high %v2572, %v2572
    %v2581 = vcombine.high %v2573, %v2573
    %v2582 = vcombine.high %v2574, %v2574
    %v2583 = vcombine.high %v2575, %v2575
    %v2588 = vsel %vm2295, %v2572, 0.0
    %v2589 = vrot.slane %v2588, 4
    %v2590 = vadd.f32 %v2588, %v2589
    %v2591 = vrot.slane %v2590, 2
    %v2592 = vadd.f32 %v2590, %v2591
    %v2593 = vrot.slane %v2592, 1
    %v2594 = vadd.f32 %v2592, %v2593
    %v2595 = vsel %vm2295, %v2580, 0.0
    %v2596 = vrot.slane %v2595, 4
    %v2597 = vadd.f32 %v2595, %v2596
    %v2598 = vrot.slane %v2597, 2
    %v2599 = vadd.f32 %v2597, %v2598
    %v2600 = vrot.slane %v2599, 1
    %v2601 = vadd.f32 %v2599, %v2600
    %v2602 = vsel %vm2295, %v2573, 0.0
    %v2603 = vrot.slane %v2602, 4
    %v2604 = vadd.f32 %v2602, %v2603
    %v2605 = vrot.slane %v2604, 2
    %v2606 = vadd.f32 %v2604, %v2605
    %v2607 = vrot.slane %v2606, 1
    %v2608 = vadd.f32 %v2606, %v2607
    %v2609 = vsel %vm2295, %v2581, 0.0
    %v2610 = vrot.slane %v2609, 4
    %v2611 = vadd.f32 %v2609, %v2610
    %v2612 = vrot.slane %v2611, 2
    %v2613 = vadd.f32 %v2611, %v2612
    %v2614 = vrot.slane %v2613, 1
    %v2615 = vadd.f32 %v2613, %v2614
    %v2616 = vsel %vm2295, %v2574, 0.0
    %v2617 = vrot.slane %v2616, 4
    %v2618 = vadd.f32 %v2616, %v2617
    %v2619 = vrot.slane %v2618, 2
    %v2620 = vadd.f32 %v2618, %v2619
    %v2621 = vrot.slane %v2620, 1
    %v2622 = vadd.f32 %v2620, %v2621
    %v2623 = vsel %vm2295, %v2582, 0.0
    %v2624 = vrot.slane %v2623, 4
    %v2625 = vadd.f32 %v2623, %v2624
    %v2626 = vrot.slane %v2625, 2
    %v2627 = vadd.f32 %v2625, %v2626
    %v2628 = vrot.slane %v2627, 1
    %v2629 = vadd.f32 %v2627, %v2628
    %v2630 = vsel %vm2295, %v2575, 0.0
    %v2631 = vrot.slane %v2630, 4
    %v2632 = vadd.f32 %v2630, %v2631
    %v2633 = vrot.slane %v2632, 2
    %v2634 = vadd.f32 %v2632, %v2633
    %v2635 = vrot.slane %v2634, 1
    %v2636 = vadd.f32 %v2634, %v2635
    %v2637 = vsel %vm2295, %v2583, 0.0
    %v2638 = vrot.slane %v2637, 4
    %v2639 = vadd.f32 %v2637, %v2638
    %v2640 = vrot.slane %v2639, 2
    %v2641 = vadd.f32 %v2639, %v2640
    %v2642 = vrot.slane %v2641, 1
    %v2643 = vadd.f32 %v2641, %v2642
    %v2652 = vsel %vm225, %v2526, %v2498
    %v2653 = vsel %vm225, %v2533, %v2505
    %v2654 = vsel %vm225, %v2540, %v2512
    %v2655 = vsel %vm225, %v2547, %v2519
    %v2664 = vsel %vm225, %v2622, %v2594
    %v2665 = vsel %vm225, %v2629, %v2601
    %v2666 = vsel %vm225, %v2636, %v2608
    %v2667 = vsel %vm225, %v2643, %v2615
    %v2668 = vcombine.low %v2652, %v2653
    %v2669 = vcombine.low %v2654, %v2655
    %v2671 = vunpack.c.l.s4 1983009808
    %v2672 = vunpack.c.0.s8 %v2671
    %v2673 = vlaneseq
    %v2674 = vshrl.u32 %v2673, 7
    %v2675 = vsub.s32 %v2672, %v2674
    %v2676 = vrot.slane %v2668, %v2675
    %v2678 = vunpack.c.l.s4 1983009808
    %v2679 = vunpack.c.0.s8 %v2678
    %v2680 = vlaneseq
    %v2681 = vshrl.u32 %v2680, 7
    %v2682 = vsub.s32 %v2679, %v2681
    %v2683 = vrot.slane %v2669, %v2682
    %v2684 = vcombine.low %v2676, %v2683
    %v2685 = vcombine.low %v2664, %v2665
    %v2686 = vcombine.low %v2666, %v2667
    %v2688 = vunpack.c.l.s4 1983009808
    %v2689 = vunpack.c.0.s8 %v2688
    %v2690 = vlaneseq
    %v2691 = vshrl.u32 %v2690, 7
    %v2692 = vsub.s32 %v2689, %v2691
    %v2693 = vrot.slane %v2685, %v2692
    %v2695 = vunpack.c.l.s4 1983009808
    %v2696 = vunpack.c.0.s8 %v2695
    %v2697 = vlaneseq
    %v2698 = vshrl.u32 %v2697, 7
    %v2699 = vsub.s32 %v2696, %v2698
    %v2700 = vrot.slane %v2686, %v2699
    %v2701 = vcombine.low %v2693, %v2700
    %2704 = vst [vmem:[#allocation9] sm:$0xff] %v2684
    %2705 = vst [vmem:[#allocation9 + $0x8] sm:$0xff] %v2701
    %2706 = vst [vmem:[#allocation10] sm:$0xff] %v2279
    %2707 = vst [vmem:[#allocation10 + $0x8] sm:$0xff] %v2281
    %2708 = vst [vmem:[#allocation10 + $0x10] sm:$0xff] %v2280
    %2709 = vst [vmem:[#allocation10 + $0x18] sm:$0xff] %v2282
    %2710 = vst [vmem:[#allocation12] sm:$0xff] %v2267
    %2711 = vst [vmem:[#allocation12 + $0x8] sm:$0xff] %v2269
    %2712 = vst [vmem:[#allocation12 + $0x10] sm:$0xff] %v2268
    %2713 = vst [vmem:[#allocation12 + $0x18] sm:$0xff] %v2270
    // Predicated region
    $region38: #{tpu_custom_call.1} parent=1 // pred_check
      _
    $region39: #{tpu_custom_call.1} parent=1 // pred_check_branch
      %2715 = sbr.rel (0) target = $region41
    $region40: #{tpu_custom_call.1} parent=1 // pred_region
      %s2717 = ssub.s32 256, 256
      %2718 = vsyncadd [#allocation5], %s2717
      %s2720 = sshll.u32 [#allocation9], 4
      %s2721 = int_to_ptr.vmem [resolvable:$true] %s2720
      %2723 = dma.vmem_to_hbm [thread:$0]  %s2721, 256, %s6, [#allocation5]
    $region41: #{tpu_custom_call.1} parent=1 // pred_fallthru
      _
    // Predicated region
    $region42: #{tpu_custom_call.1} parent=1 // pred_check
      _
    $region43: #{tpu_custom_call.1} parent=1 // pred_check_branch
      %2725 = sbr.rel (0) target = $region45
    $region44: #{tpu_custom_call.1} parent=1 // pred_region
      %s2727 = ssub.s32 512, 512
      %2728 = vsyncadd [#allocation11], %s2727
      %s2729 = sshll.u32 [#allocation10], 4
      %s2730 = int_to_ptr.vmem [resolvable:$true] %s2729
      %2735 = dma.vmem_to_hbm [thread:$0]  %s2730, 512, %s7, [#allocation11], 256, 256, 16
    $region45: #{tpu_custom_call.1} parent=1 // pred_fallthru
      _
    // Predicated region
    $region46: #{tpu_custom_call.1} parent=1 // pred_check
      _
    $region47: #{tpu_custom_call.1} parent=1 // pred_check_branch
      %2737 = sbr.rel (0) target = $region49
    $region48: #{tpu_custom_call.1} parent=1 // pred_region
      %s2739 = ssub.s32 512, 512
      %2740 = vsyncadd [#allocation11], %s2739
      %s2741 = sshll.u32 [#allocation12], 4
      %s2742 = int_to_ptr.vmem [resolvable:$true] %s2741
      %2747 = dma.vmem_to_hbm [thread:$0]  %s2742, 512, %s8, [#allocation11], 256, 256, 16
    $region49: #{tpu_custom_call.1} parent=1 // pred_fallthru
      _
    // Predicated region
    $region50: #{tpu_custom_call.1} parent=1 // pred_check
      _
    $region51: #{tpu_custom_call.1} parent=1 // pred_check_branch
      %2749 = sbr.rel (0) target = $region53
    $region52: #{tpu_custom_call.1} parent=1 // pred_region
      %2750 = dma.done [#allocation5], 256
    $region53: #{tpu_custom_call.1} parent=1 // pred_fallthru
      _
    // Predicated region
    $region54: #{tpu_custom_call.1} parent=1 // pred_check
      _
    $region55: #{tpu_custom_call.1} parent=1 // pred_check_branch
      %2752 = sbr.rel (0) target = $region57
    $region56: #{tpu_custom_call.1} parent=1 // pred_region
      %2753 = dma.done [#allocation11], 512
    $region57: #{tpu_custom_call.1} parent=1 // pred_fallthru
      _
    // Predicated region
    $region58: #{tpu_custom_call.1} parent=1 // pred_check
      _
    $region59: #{tpu_custom_call.1} parent=1 // pred_check_branch
      %2755 = sbr.rel (0) target = $region61
    $region60: #{tpu_custom_call.1} parent=1 // pred_region
      %2756 = dma.done [#allocation11], 512
    $region61: #{tpu_custom_call.1} parent=1 // pred_fallthru
      _
    %2757 = vsyncpa [#allocation4], 1
    %2758 = vsyncpa [#allocation7], 1
    %2759 = vsyncpa [#allocation5], 1
    %2760 = vsyncpa [#allocation11], 1

</llo_original>
